<compile_context>
chip_gen: v7x
topology: tpu7x:2x2x1
jax: 0.10.0
libtpu: 0.0.40
codegen_flags: <defaults>
</compile_context>

<pallas_src>
import functools

import jax
import jax.numpy as jnp
from jax.experimental import pallas as pl
from jax.experimental.pallas import tpu as pltpu

WIDTHS = (3, 4, 5)
LANE = 128          # class dimension padded to one full lane tile -> lane-dense stores


def textcnn_kernel(tok_ref, emb_ref, wcat_ref, bcat_ref, wl_ref, bl_ref,
                   out_ref, xbuf_ref):
    """Fused TextCNN forward for one batch tile.

    tok_ref : (B_pad, L) int32  SMEM (scalar prefetch)   token ids
    emb_ref : (vocab, D) f32    VMEM                     embedding table
    wcat_ref: (D, 12*Co) bf16   VMEM                     all conv taps, concatenated
    bcat_ref: (1, 3*Co)  f32    VMEM                     conv biases, concatenated
    wl_ref  : (3*Co, LANE) f32  VMEM                     linear W, zero-padded cols
    bl_ref  : (1, LANE)  f32    VMEM                     linear b, -1e30-padded cols
    out_ref : (1, TB, LANE) f32 VMEM                     softmax probabilities
    xbuf_ref: (TB*L, D)  f32    VMEM scratch             gathered embeddings
    """
    i = pl.program_id(0)
    TB = out_ref.shape[1]
    TBL, D = xbuf_ref.shape
    L = TBL // TB
    Co = bcat_ref.shape[1] // len(WIDTHS)

    # ---- fused embedding gather (token ids are SMEM scalars) --------------------------
    for r in range(TBL):                         # static unroll: TB*L independent row copies
        bb, ll = divmod(r, L)
        tok = tok_ref[i * TB + bb, ll]
        xbuf_ref[pl.ds(r, 1), :] = emb_ref[pl.ds(tok, 1), :]
    # Dropout on the embeddings is identity in eval mode.

    # ---- all conv taps as ONE lane-dense MXU matmul (bf16 in, f32 accumulate) ---------
    x = xbuf_ref[...].astype(jnp.bfloat16)                              # (TB*L, D)
    y = jnp.dot(x, wcat_ref[...], preferred_element_type=jnp.float32)   # (TB*L, 12*Co)
    y = y.reshape(TB, L, sum(WIDTHS) * Co)                              # (TB, L, 12*Co)

    # ---- recombine taps with shifted slices, max-pool over time -----------------------
    pooled = []
    tap = 0
    for w in WIDTHS:
        lout = L - w + 1
        acc = y[:, 0:lout, tap * Co:(tap + 1) * Co]                     # init from tap 0
        for dw in range(1, w):
            acc = acc + y[:, dw:dw + lout, (tap + dw) * Co:(tap + dw + 1) * Co]
        pooled.append(jnp.max(acc, axis=1))                             # (TB, Co)
        tap += w

    # conv bias + ReLU after the pool (monotone ops commute with max over time)
    feat = jnp.concatenate(pooled, axis=-1)                             # (TB, 3*Co)
    feat = jnp.maximum(feat + bcat_ref[...], 0.0)
    # Dropout on the pooled features is identity in eval mode.

    # ---- single linear matmul (class dim padded to LANE) + f32 softmax ----------------
    logits = jnp.dot(feat, wl_ref[...], preferred_element_type=jnp.float32)
    logits = logits + bl_ref[...]                                       # pads hold -1e30
    m = jnp.max(logits, axis=-1, keepdims=True)
    e = jnp.exp(logits - m)
    out_ref[0] = (e / jnp.sum(e, axis=-1, keepdims=True)).astype(out_ref.dtype)


def pack_params(params):
    """Host-side, one-time re-packing of torch-layout params into the fused kernel layout."""
    # Conv weights (w, D, Co) per width -> one (D, 12*Co) bf16 matrix, taps in order
    # (w=3: dw 0..2, w=4: dw 0..3, w=5: dw 0..4), matching the kernel's column slicing.
    w_cat = jnp.concatenate([params[f'w{w}'][dw] for w in WIDTHS for dw in range(w)],
                            axis=1)                                     # (D, 12*Co)
    b_cat = jnp.concatenate([params[f'b{w}'] for w in WIDTHS], axis=1)  # (1, 3*Co)
    d_out, nl = params['wl'].shape
    wl_pad = jnp.zeros((d_out, LANE), jnp.float32).at[:, :nl].set(params['wl'])
    bl_pad = jnp.full((1, LANE), -1e30, jnp.float32).at[:, :nl].set(params['bl'])
    return {
        'emb': params['embedding'].astype(jnp.float32),   # f32 table: safe dynamic row slices
        'w_cat': w_cat.astype(jnp.bfloat16),              # bf16 MXU operand
        'b_cat': b_cat.astype(jnp.float32),
        'wl_pad': wl_pad,
        'bl_pad': bl_pad,
    }


@functools.partial(jax.jit, static_argnames=('num_labels', 'batch_tile'))
def textcnn_forward(token_ids, kparams, *, num_labels, batch_tile=8):
    B, L = token_ids.shape
    vocab, D = kparams['emb'].shape

    TB = min(batch_tile, B)
    nb = (B + TB - 1) // TB
    B_pad = nb * TB
    if B_pad != B:
        token_ids = jnp.pad(token_ids, ((0, B_pad - B), (0, 0)))
    token_ids = token_ids.astype(jnp.int32)

    grid_spec = pltpu.PrefetchScalarGridSpec(
        num_scalar_prefetch=1,                  # token ids -> SMEM, visible to index_maps
        grid=(nb,),
        in_specs=[
            pl.BlockSpec((vocab, D), lambda i, tok: (0, 0)),                 # embedding
            pl.BlockSpec(kparams['w_cat'].shape, lambda i, tok: (0, 0)),     # fused conv W
            pl.BlockSpec(kparams['b_cat'].shape, lambda i, tok: (0, 0)),     # fused conv b
            pl.BlockSpec(kparams['wl_pad'].shape, lambda i, tok: (0, 0)),    # linear W (padded)
            pl.BlockSpec(kparams['bl_pad'].shape, lambda i, tok: (0, 0)),    # linear b (padded)
        ],
        out_specs=pl.BlockSpec((1, TB, LANE), lambda i, tok: (i, 0, 0)),
        scratch_shapes=[pltpu.VMEM((TB * L, D), jnp.float32)],
    )
    out = pl.pallas_call(
        textcnn_kernel,
        out_shape=jax.ShapeDtypeStruct((nb, TB, LANE), jnp.float32),
        grid_spec=grid_spec,
        compiler_params=pltpu.CompilerParams(
            dimension_semantics=("parallel",),  # independent batch tiles (megacore / v7x 2 TCs)
            # When scaling B/L/Co toward production shapes, set vmem_limit_bytes here and
            # size TB against 64 MiB (v7x) / 128 MiB (v5e/v6e) VMEM with 2x double-buffering.
        ),
    )(token_ids, kparams['emb'], kparams['w_cat'], kparams['b_cat'],
      kparams['wl_pad'], kparams['bl_pad'])
    return out.reshape(B_pad, LANE)[:B, :num_labels]


def init_params(key, vocab, embed_dim, filters, num_labels):
    """Deterministic synthetic parameters matching the torch module's shapes.
    Conv2d(1, Co, (w, D)) weights stored as (w, D, Co); Linear weight as (3*Co, num_labels)."""
    keys = jax.random.split(key, 9)
    params = {'embedding': jax.random.normal(keys[0], (vocab, embed_dim), jnp.float32)}
    for i, w in enumerate(WIDTHS):
        fan_in = w * embed_dim
        bound = 1.0 / float(fan_in) ** 0.5
        params[f'w{w}'] = jax.random.uniform(keys[1 + 2 * i], (w, embed_dim, filters),
                                             jnp.float32, -bound, bound)
        params[f'b{w}'] = jax.random.uniform(keys[2 + 2 * i], (1, filters),
                                             jnp.float32, -bound, bound)
    d_out = len(WIDTHS) * filters
    bound = 1.0 / float(d_out) ** 0.5
    params['wl'] = jax.random.uniform(keys[7], (d_out, num_labels), jnp.float32, -bound, bound)
    params['bl'] = jax.random.uniform(keys[8], (1, num_labels), jnp.float32, -bound, bound)
    return params


def reference_forward(token_ids, params):
    """Pure-JAX reference with the torch module's op order (eval mode); bf16 matmul
    operands + f32 accumulation to mirror the kernel's numerics."""
    x = params['embedding'][token_ids].astype(jnp.bfloat16)            # (B, L, D)
    B, L, D = x.shape
    feats = []
    for w in WIDTHS:
        lout = L - w + 1
        wt = params[f'w{w}'].astype(jnp.bfloat16)                      # (w, D, Co)
        acc = jnp.zeros((B, lout, wt.shape[-1]), jnp.float32)
        for dw in range(w):
            acc = acc + jnp.einsum('bld,dc->blc', x[:, dw:dw + lout, :], wt[dw],
                                   preferred_element_type=jnp.float32)
        acc = jax.nn.relu(acc + params[f'b{w}'][None, :, :])           # conv bias + ReLU
        feats.append(jnp.max(acc, axis=1))                             # max_pool1d over time
    feat = jnp.concatenate(feats, axis=1)                              # (B, 3*Co)
    logits = feat @ params['wl'] + params['bl']
    return jax.nn.softmax(logits, axis=-1)


if __name__ == "__main__":
    # Small shapes consistent with the module: hidden_size (filters) = 32 per width
    # -> d_out = 96, num_labels = 2; vocab = 64, L = 16 tokens, D = 32, batch = 4.
    # batch_tile = 2 -> grid of 2 parallel batch tiles.
    B, L, D = 4, 16, 32
    vocab, filters, num_labels = 64, 32, 2

    key = jax.random.PRNGKey(0)
    pkey, tkey = jax.random.split(key)
    params = init_params(pkey, vocab, D, filters, num_labels)
    tokens = jax.random.randint(tkey, (B, L), 0, vocab, dtype=jnp.int32)

    kparams = pack_params(params)
    out = jax.block_until_ready(
        textcnn_forward(tokens, kparams, num_labels=num_labels, batch_tile=2))
    ref = reference_forward(tokens, params)

    assert out.shape == (B, num_labels), out.shape
    assert bool(jnp.all(jnp.isfinite(out)))
    assert jnp.allclose(out, ref, atol=1e-4, rtol=1e-4), (out, ref)
    # TODO(synk): dropout is treated as identity (eval mode); no stochastic dropout kernel.
    print("KERNEL_OK")
</pallas_src>

<mosaic_0001>
module attributes {stable_mosaic.version = 11 : i64} {
  func.func @textcnn_kernel(%arg0: i32, %arg1: memref<4x16xi32, #tpu.memory_space<smem>>, %arg2: memref<64x32xf32, #tpu.memory_space<vmem>>, %arg3: memref<32x384xbf16, #tpu.memory_space<vmem>>, %arg4: memref<1x96xf32, #tpu.memory_space<vmem>>, %arg5: memref<96x128xf32, #tpu.memory_space<vmem>>, %arg6: memref<1x128xf32, #tpu.memory_space<vmem>>, %arg7: memref<1x2x128xf32, #tpu.memory_space<vmem>>, %arg8: memref<32x32xf32, #tpu.memory_space<vmem>>) attributes {dimension_semantics = [#tpu.dimension_semantics<parallel>], iteration_bounds = array<i64: 2>, scalar_prefetch = 1 : i64, scratch_operands = 1 : i64, tpu.core_type = #tpu.core_type<tc>, window_params = [{pipeline_mode = #tpu.pipeline_mode<synchronous>, transform_indices = @transform_0, window_bounds = array<i64: 64, 32>}, {pipeline_mode = #tpu.pipeline_mode<synchronous>, transform_indices = @transform_1, window_bounds = array<i64: 32, 384>}, {pipeline_mode = #tpu.pipeline_mode<synchronous>, transform_indices = @transform_2, window_bounds = array<i64: 1, 96>}, {pipeline_mode = #tpu.pipeline_mode<synchronous>, transform_indices = @transform_3, window_bounds = array<i64: 96, 128>}, {pipeline_mode = #tpu.pipeline_mode<synchronous>, transform_indices = @transform_4, window_bounds = array<i64: 1, 128>}, {transform_indices = @transform_5, window_bounds = array<i64: 1, 2, 128>}]} {
    %c2_i32 = arith.constant 2 : i32
    %0 = arith.muli %arg0, %c2_i32 : i32
    %c0_i32 = arith.constant 0 : i32
    %1 = arith.addi %0, %c0_i32 : i32
    %2 = arith.index_cast %1 : i32 to index
    %c0 = arith.constant 0 : index
    %3 = memref.load %arg1[%2, %c0] : memref<4x16xi32, #tpu.memory_space<smem>>
    %4 = arith.index_cast %3 : i32 to index
    %c0_0 = arith.constant 0 : index
    %5 = vector.load %arg2[%4, %c0_0] : memref<64x32xf32, #tpu.memory_space<vmem>>, vector<1x32xf32>
    %c0_1 = arith.constant 0 : index
    %c0_2 = arith.constant 0 : index
    %6 = vector.load %arg8[%c0_1, %c0_2] : memref<32x32xf32, #tpu.memory_space<vmem>>, vector<1x32xf32>
    tpu.vector_store %arg8[%c0_1, %c0_2], %5 {strides = array<i32>} : memref<32x32xf32, #tpu.memory_space<vmem>>, vector<1x32xf32>,
    %c2_i32_3 = arith.constant 2 : i32
    %7 = arith.muli %arg0, %c2_i32_3 : i32
    %c0_i32_4 = arith.constant 0 : i32
    %8 = arith.addi %7, %c0_i32_4 : i32
    %9 = arith.index_cast %8 : i32 to index
    %c1 = arith.constant 1 : index
    %10 = memref.load %arg1[%9, %c1] : memref<4x16xi32, #tpu.memory_space<smem>>
    %11 = arith.index_cast %10 : i32 to index
    %c0_5 = arith.constant 0 : index
    %12 = vector.load %arg2[%11, %c0_5] : memref<64x32xf32, #tpu.memory_space<vmem>>, vector<1x32xf32>
    %c1_6 = arith.constant 1 : index
    %c0_7 = arith.constant 0 : index
    %13 = vector.load %arg8[%c1_6, %c0_7] : memref<32x32xf32, #tpu.memory_space<vmem>>, vector<1x32xf32>
    tpu.vector_store %arg8[%c1_6, %c0_7], %12 {strides = array<i32>} : memref<32x32xf32, #tpu.memory_space<vmem>>, vector<1x32xf32>,
    %c2_i32_8 = arith.constant 2 : i32
    %14 = arith.muli %arg0, %c2_i32_8 : i32
    %c0_i32_9 = arith.constant 0 : i32
    %15 = arith.addi %14, %c0_i32_9 : i32
    %16 = arith.index_cast %15 : i32 to index
    %c2 = arith.constant 2 : index
    %17 = memref.load %arg1[%16, %c2] : memref<4x16xi32, #tpu.memory_space<smem>>
    %18 = arith.index_cast %17 : i32 to index
    %c0_10 = arith.constant 0 : index
    %19 = vector.load %arg2[%18, %c0_10] : memref<64x32xf32, #tpu.memory_space<vmem>>, vector<1x32xf32>
    %c2_11 = arith.constant 2 : index
    %c0_12 = arith.constant 0 : index
    %20 = vector.load %arg8[%c2_11, %c0_12] : memref<32x32xf32, #tpu.memory_space<vmem>>, vector<1x32xf32>
    tpu.vector_store %arg8[%c2_11, %c0_12], %19 {strides = array<i32>} : memref<32x32xf32, #tpu.memory_space<vmem>>, vector<1x32xf32>,
    %c2_i32_13 = arith.constant 2 : i32
    %21 = arith.muli %arg0, %c2_i32_13 : i32
    %c0_i32_14 = arith.constant 0 : i32
    %22 = arith.addi %21, %c0_i32_14 : i32
    %23 = arith.index_cast %22 : i32 to index
    %c3 = arith.constant 3 : index
    %24 = memref.load %arg1[%23, %c3] : memref<4x16xi32, #tpu.memory_space<smem>>
    %25 = arith.index_cast %24 : i32 to index
    %c0_15 = arith.constant 0 : index
    %26 = vector.load %arg2[%25, %c0_15] : memref<64x32xf32, #tpu.memory_space<vmem>>, vector<1x32xf32>
    %c3_16 = arith.constant 3 : index
    %c0_17 = arith.constant 0 : index
    %27 = vector.load %arg8[%c3_16, %c0_17] : memref<32x32xf32, #tpu.memory_space<vmem>>, vector<1x32xf32>
    tpu.vector_store %arg8[%c3_16, %c0_17], %26 {strides = array<i32>} : memref<32x32xf32, #tpu.memory_space<vmem>>, vector<1x32xf32>,
    %c2_i32_18 = arith.constant 2 : i32
    %28 = arith.muli %arg0, %c2_i32_18 : i32
    %c0_i32_19 = arith.constant 0 : i32
    %29 = arith.addi %28, %c0_i32_19 : i32
    %30 = arith.index_cast %29 : i32 to index
    %c4 = arith.constant 4 : index
    %31 = memref.load %arg1[%30, %c4] : memref<4x16xi32, #tpu.memory_space<smem>>
    %32 = arith.index_cast %31 : i32 to index
    %c0_20 = arith.constant 0 : index
    %33 = vector.load %arg2[%32, %c0_20] : memref<64x32xf32, #tpu.memory_space<vmem>>, vector<1x32xf32>
    %c4_21 = arith.constant 4 : index
    %c0_22 = arith.constant 0 : index
    %34 = vector.load %arg8[%c4_21, %c0_22] : memref<32x32xf32, #tpu.memory_space<vmem>>, vector<1x32xf32>
    tpu.vector_store %arg8[%c4_21, %c0_22], %33 {strides = array<i32>} : memref<32x32xf32, #tpu.memory_space<vmem>>, vector<1x32xf32>,
    %c2_i32_23 = arith.constant 2 : i32
    %35 = arith.muli %arg0, %c2_i32_23 : i32
    %c0_i32_24 = arith.constant 0 : i32
    %36 = arith.addi %35, %c0_i32_24 : i32
    %37 = arith.index_cast %36 : i32 to index
    %c5 = arith.constant 5 : index
    %38 = memref.load %arg1[%37, %c5] : memref<4x16xi32, #tpu.memory_space<smem>>
    %39 = arith.index_cast %38 : i32 to index
    %c0_25 = arith.constant 0 : index
    %40 = vector.load %arg2[%39, %c0_25] : memref<64x32xf32, #tpu.memory_space<vmem>>, vector<1x32xf32>
    %c5_26 = arith.constant 5 : index
    %c0_27 = arith.constant 0 : index
    %41 = vector.load %arg8[%c5_26, %c0_27] : memref<32x32xf32, #tpu.memory_space<vmem>>, vector<1x32xf32>
    tpu.vector_store %arg8[%c5_26, %c0_27], %40 {strides = array<i32>} : memref<32x32xf32, #tpu.memory_space<vmem>>, vector<1x32xf32>,
    %c2_i32_28 = arith.constant 2 : i32
    %42 = arith.muli %arg0, %c2_i32_28 : i32
    %c0_i32_29 = arith.constant 0 : i32
    %43 = arith.addi %42, %c0_i32_29 : i32
    %44 = arith.index_cast %43 : i32 to index
    %c6 = arith.constant 6 : index
    %45 = memref.load %arg1[%44, %c6] : memref<4x16xi32, #tpu.memory_space<smem>>
    %46 = arith.index_cast %45 : i32 to index
    %c0_30 = arith.constant 0 : index
    %47 = vector.load %arg2[%46, %c0_30] : memref<64x32xf32, #tpu.memory_space<vmem>>, vector<1x32xf32>
    %c6_31 = arith.constant 6 : index
    %c0_32 = arith.constant 0 : index
    %48 = vector.load %arg8[%c6_31, %c0_32] : memref<32x32xf32, #tpu.memory_space<vmem>>, vector<1x32xf32>
    tpu.vector_store %arg8[%c6_31, %c0_32], %47 {strides = array<i32>} : memref<32x32xf32, #tpu.memory_space<vmem>>, vector<1x32xf32>,
    %c2_i32_33 = arith.constant 2 : i32
    %49 = arith.muli %arg0, %c2_i32_33 : i32
    %c0_i32_34 = arith.constant 0 : i32
    %50 = arith.addi %49, %c0_i32_34 : i32
    %51 = arith.index_cast %50 : i32 to index
    %c7 = arith.constant 7 : index
    %52 = memref.load %arg1[%51, %c7] : memref<4x16xi32, #tpu.memory_space<smem>>
    %53 = arith.index_cast %52 : i32 to index
    %c0_35 = arith.constant 0 : index
    %54 = vector.load %arg2[%53, %c0_35] : memref<64x32xf32, #tpu.memory_space<vmem>>, vector<1x32xf32>
    %c7_36 = arith.constant 7 : index
    %c0_37 = arith.constant 0 : index
    %55 = vector.load %arg8[%c7_36, %c0_37] : memref<32x32xf32, #tpu.memory_space<vmem>>, vector<1x32xf32>
    tpu.vector_store %arg8[%c7_36, %c0_37], %54 {strides = array<i32>} : memref<32x32xf32, #tpu.memory_space<vmem>>, vector<1x32xf32>,
    %c2_i32_38 = arith.constant 2 : i32
    %56 = arith.muli %arg0, %c2_i32_38 : i32
    %c0_i32_39 = arith.constant 0 : i32
    %57 = arith.addi %56, %c0_i32_39 : i32
    %58 = arith.index_cast %57 : i32 to index
    %c8 = arith.constant 8 : index
    %59 = memref.load %arg1[%58, %c8] : memref<4x16xi32, #tpu.memory_space<smem>>
    %60 = arith.index_cast %59 : i32 to index
    %c0_40 = arith.constant 0 : index
    %61 = vector.load %arg2[%60, %c0_40] : memref<64x32xf32, #tpu.memory_space<vmem>>, vector<1x32xf32>
    %c8_41 = arith.constant 8 : index
    %c0_42 = arith.constant 0 : index
    %62 = vector.load %arg8[%c8_41, %c0_42] : memref<32x32xf32, #tpu.memory_space<vmem>>, vector<1x32xf32>
    tpu.vector_store %arg8[%c8_41, %c0_42], %61 {strides = array<i32>} : memref<32x32xf32, #tpu.memory_space<vmem>>, vector<1x32xf32>,
    %c2_i32_43 = arith.constant 2 : i32
    %63 = arith.muli %arg0, %c2_i32_43 : i32
    %c0_i32_44 = arith.constant 0 : i32
    %64 = arith.addi %63, %c0_i32_44 : i32
    %65 = arith.index_cast %64 : i32 to index
    %c9 = arith.constant 9 : index
    %66 = memref.load %arg1[%65, %c9] : memref<4x16xi32, #tpu.memory_space<smem>>
    %67 = arith.index_cast %66 : i32 to index
    %c0_45 = arith.constant 0 : index
    %68 = vector.load %arg2[%67, %c0_45] : memref<64x32xf32, #tpu.memory_space<vmem>>, vector<1x32xf32>
    %c9_46 = arith.constant 9 : index
    %c0_47 = arith.constant 0 : index
    %69 = vector.load %arg8[%c9_46, %c0_47] : memref<32x32xf32, #tpu.memory_space<vmem>>, vector<1x32xf32>
    tpu.vector_store %arg8[%c9_46, %c0_47], %68 {strides = array<i32>} : memref<32x32xf32, #tpu.memory_space<vmem>>, vector<1x32xf32>,
    %c2_i32_48 = arith.constant 2 : i32
    %70 = arith.muli %arg0, %c2_i32_48 : i32
    %c0_i32_49 = arith.constant 0 : i32
    %71 = arith.addi %70, %c0_i32_49 : i32
    %72 = arith.index_cast %71 : i32 to index
    %c10 = arith.constant 10 : index
    %73 = memref.load %arg1[%72, %c10] : memref<4x16xi32, #tpu.memory_space<smem>>
    %74 = arith.index_cast %73 : i32 to index
    %c0_50 = arith.constant 0 : index
    %75 = vector.load %arg2[%74, %c0_50] : memref<64x32xf32, #tpu.memory_space<vmem>>, vector<1x32xf32>
    %c10_51 = arith.constant 10 : index
    %c0_52 = arith.constant 0 : index
    %76 = vector.load %arg8[%c10_51, %c0_52] : memref<32x32xf32, #tpu.memory_space<vmem>>, vector<1x32xf32>
    tpu.vector_store %arg8[%c10_51, %c0_52], %75 {strides = array<i32>} : memref<32x32xf32, #tpu.memory_space<vmem>>, vector<1x32xf32>,
    %c2_i32_53 = arith.constant 2 : i32
    %77 = arith.muli %arg0, %c2_i32_53 : i32
    %c0_i32_54 = arith.constant 0 : i32
    %78 = arith.addi %77, %c0_i32_54 : i32
    %79 = arith.index_cast %78 : i32 to index
    %c11 = arith.constant 11 : index
    %80 = memref.load %arg1[%79, %c11] : memref<4x16xi32, #tpu.memory_space<smem>>
    %81 = arith.index_cast %80 : i32 to index
    %c0_55 = arith.constant 0 : index
    %82 = vector.load %arg2[%81, %c0_55] : memref<64x32xf32, #tpu.memory_space<vmem>>, vector<1x32xf32>
    %c11_56 = arith.constant 11 : index
    %c0_57 = arith.constant 0 : index
    %83 = vector.load %arg8[%c11_56, %c0_57] : memref<32x32xf32, #tpu.memory_space<vmem>>, vector<1x32xf32>
    tpu.vector_store %arg8[%c11_56, %c0_57], %82 {strides = array<i32>} : memref<32x32xf32, #tpu.memory_space<vmem>>, vector<1x32xf32>,
    %c2_i32_58 = arith.constant 2 : i32
    %84 = arith.muli %arg0, %c2_i32_58 : i32
    %c0_i32_59 = arith.constant 0 : i32
    %85 = arith.addi %84, %c0_i32_59 : i32
    %86 = arith.index_cast %85 : i32 to index
    %c12 = arith.constant 12 : index
    %87 = memref.load %arg1[%86, %c12] : memref<4x16xi32, #tpu.memory_space<smem>>
    %88 = arith.index_cast %87 : i32 to index
    %c0_60 = arith.constant 0 : index
    %89 = vector.load %arg2[%88, %c0_60] : memref<64x32xf32, #tpu.memory_space<vmem>>, vector<1x32xf32>
    %c12_61 = arith.constant 12 : index
    %c0_62 = arith.constant 0 : index
    %90 = vector.load %arg8[%c12_61, %c0_62] : memref<32x32xf32, #tpu.memory_space<vmem>>, vector<1x32xf32>
    tpu.vector_store %arg8[%c12_61, %c0_62], %89 {strides = array<i32>} : memref<32x32xf32, #tpu.memory_space<vmem>>, vector<1x32xf32>,
    %c2_i32_63 = arith.constant 2 : i32
    %91 = arith.muli %arg0, %c2_i32_63 : i32
    %c0_i32_64 = arith.constant 0 : i32
    %92 = arith.addi %91, %c0_i32_64 : i32
    %93 = arith.index_cast %92 : i32 to index
    %c13 = arith.constant 13 : index
    %94 = memref.load %arg1[%93, %c13] : memref<4x16xi32, #tpu.memory_space<smem>>
    %95 = arith.index_cast %94 : i32 to index
    %c0_65 = arith.constant 0 : index
    %96 = vector.load %arg2[%95, %c0_65] : memref<64x32xf32, #tpu.memory_space<vmem>>, vector<1x32xf32>
    %c13_66 = arith.constant 13 : index
    %c0_67 = arith.constant 0 : index
    %97 = vector.load %arg8[%c13_66, %c0_67] : memref<32x32xf32, #tpu.memory_space<vmem>>, vector<1x32xf32>
    tpu.vector_store %arg8[%c13_66, %c0_67], %96 {strides = array<i32>} : memref<32x32xf32, #tpu.memory_space<vmem>>, vector<1x32xf32>,
    %c2_i32_68 = arith.constant 2 : i32
    %98 = arith.muli %arg0, %c2_i32_68 : i32
    %c0_i32_69 = arith.constant 0 : i32
    %99 = arith.addi %98, %c0_i32_69 : i32
    %100 = arith.index_cast %99 : i32 to index
    %c14 = arith.constant 14 : index
    %101 = memref.load %arg1[%100, %c14] : memref<4x16xi32, #tpu.memory_space<smem>>
    %102 = arith.index_cast %101 : i32 to index
    %c0_70 = arith.constant 0 : index
    %103 = vector.load %arg2[%102, %c0_70] : memref<64x32xf32, #tpu.memory_space<vmem>>, vector<1x32xf32>
    %c14_71 = arith.constant 14 : index
    %c0_72 = arith.constant 0 : index
    %104 = vector.load %arg8[%c14_71, %c0_72] : memref<32x32xf32, #tpu.memory_space<vmem>>, vector<1x32xf32>
    tpu.vector_store %arg8[%c14_71, %c0_72], %103 {strides = array<i32>} : memref<32x32xf32, #tpu.memory_space<vmem>>, vector<1x32xf32>,
    %c2_i32_73 = arith.constant 2 : i32
    %105 = arith.muli %arg0, %c2_i32_73 : i32
    %c0_i32_74 = arith.constant 0 : i32
    %106 = arith.addi %105, %c0_i32_74 : i32
    %107 = arith.index_cast %106 : i32 to index
    %c15 = arith.constant 15 : index
    %108 = memref.load %arg1[%107, %c15] : memref<4x16xi32, #tpu.memory_space<smem>>
    %109 = arith.index_cast %108 : i32 to index
    %c0_75 = arith.constant 0 : index
    %110 = vector.load %arg2[%109, %c0_75] : memref<64x32xf32, #tpu.memory_space<vmem>>, vector<1x32xf32>
    %c15_76 = arith.constant 15 : index
    %c0_77 = arith.constant 0 : index
    %111 = vector.load %arg8[%c15_76, %c0_77] : memref<32x32xf32, #tpu.memory_space<vmem>>, vector<1x32xf32>
    tpu.vector_store %arg8[%c15_76, %c0_77], %110 {strides = array<i32>} : memref<32x32xf32, #tpu.memory_space<vmem>>, vector<1x32xf32>,
    %c2_i32_78 = arith.constant 2 : i32
    %112 = arith.muli %arg0, %c2_i32_78 : i32
    %c1_i32 = arith.constant 1 : i32
    %113 = arith.addi %112, %c1_i32 : i32
    %114 = arith.index_cast %113 : i32 to index
    %c0_79 = arith.constant 0 : index
    %115 = memref.load %arg1[%114, %c0_79] : memref<4x16xi32, #tpu.memory_space<smem>>
    %116 = arith.index_cast %115 : i32 to index
    %c0_80 = arith.constant 0 : index
    %117 = vector.load %arg2[%116, %c0_80] : memref<64x32xf32, #tpu.memory_space<vmem>>, vector<1x32xf32>
    %c16 = arith.constant 16 : index
    %c0_81 = arith.constant 0 : index
    %118 = vector.load %arg8[%c16, %c0_81] : memref<32x32xf32, #tpu.memory_space<vmem>>, vector<1x32xf32>
    tpu.vector_store %arg8[%c16, %c0_81], %117 {strides = array<i32>} : memref<32x32xf32, #tpu.memory_space<vmem>>, vector<1x32xf32>,
    %c2_i32_82 = arith.constant 2 : i32
    %119 = arith.muli %arg0, %c2_i32_82 : i32
    %c1_i32_83 = arith.constant 1 : i32
    %120 = arith.addi %119, %c1_i32_83 : i32
    %121 = arith.index_cast %120 : i32 to index
    %c1_84 = arith.constant 1 : index
    %122 = memref.load %arg1[%121, %c1_84] : memref<4x16xi32, #tpu.memory_space<smem>>
    %123 = arith.index_cast %122 : i32 to index
    %c0_85 = arith.constant 0 : index
    %124 = vector.load %arg2[%123, %c0_85] : memref<64x32xf32, #tpu.memory_space<vmem>>, vector<1x32xf32>
    %c17 = arith.constant 17 : index
    %c0_86 = arith.constant 0 : index
    %125 = vector.load %arg8[%c17, %c0_86] : memref<32x32xf32, #tpu.memory_space<vmem>>, vector<1x32xf32>
    tpu.vector_store %arg8[%c17, %c0_86], %124 {strides = array<i32>} : memref<32x32xf32, #tpu.memory_space<vmem>>, vector<1x32xf32>,
    %c2_i32_87 = arith.constant 2 : i32
    %126 = arith.muli %arg0, %c2_i32_87 : i32
    %c1_i32_88 = arith.constant 1 : i32
    %127 = arith.addi %126, %c1_i32_88 : i32
    %128 = arith.index_cast %127 : i32 to index
    %c2_89 = arith.constant 2 : index
    %129 = memref.load %arg1[%128, %c2_89] : memref<4x16xi32, #tpu.memory_space<smem>>
    %130 = arith.index_cast %129 : i32 to index
    %c0_90 = arith.constant 0 : index
    %131 = vector.load %arg2[%130, %c0_90] : memref<64x32xf32, #tpu.memory_space<vmem>>, vector<1x32xf32>
    %c18 = arith.constant 18 : index
    %c0_91 = arith.constant 0 : index
    %132 = vector.load %arg8[%c18, %c0_91] : memref<32x32xf32, #tpu.memory_space<vmem>>, vector<1x32xf32>
    tpu.vector_store %arg8[%c18, %c0_91], %131 {strides = array<i32>} : memref<32x32xf32, #tpu.memory_space<vmem>>, vector<1x32xf32>,
    %c2_i32_92 = arith.constant 2 : i32
    %133 = arith.muli %arg0, %c2_i32_92 : i32
    %c1_i32_93 = arith.constant 1 : i32
    %134 = arith.addi %133, %c1_i32_93 : i32
    %135 = arith.index_cast %134 : i32 to index
    %c3_94 = arith.constant 3 : index
    %136 = memref.load %arg1[%135, %c3_94] : memref<4x16xi32, #tpu.memory_space<smem>>
    %137 = arith.index_cast %136 : i32 to index
    %c0_95 = arith.constant 0 : index
    %138 = vector.load %arg2[%137, %c0_95] : memref<64x32xf32, #tpu.memory_space<vmem>>, vector<1x32xf32>
    %c19 = arith.constant 19 : index
    %c0_96 = arith.constant 0 : index
    %139 = vector.load %arg8[%c19, %c0_96] : memref<32x32xf32, #tpu.memory_space<vmem>>, vector<1x32xf32>
    tpu.vector_store %arg8[%c19, %c0_96], %138 {strides = array<i32>} : memref<32x32xf32, #tpu.memory_space<vmem>>, vector<1x32xf32>,
    %c2_i32_97 = arith.constant 2 : i32
    %140 = arith.muli %arg0, %c2_i32_97 : i32
    %c1_i32_98 = arith.constant 1 : i32
    %141 = arith.addi %140, %c1_i32_98 : i32
    %142 = arith.index_cast %141 : i32 to index
    %c4_99 = arith.constant 4 : index
    %143 = memref.load %arg1[%142, %c4_99] : memref<4x16xi32, #tpu.memory_space<smem>>
    %144 = arith.index_cast %143 : i32 to index
    %c0_100 = arith.constant 0 : index
    %145 = vector.load %arg2[%144, %c0_100] : memref<64x32xf32, #tpu.memory_space<vmem>>, vector<1x32xf32>
    %c20 = arith.constant 20 : index
    %c0_101 = arith.constant 0 : index
    %146 = vector.load %arg8[%c20, %c0_101] : memref<32x32xf32, #tpu.memory_space<vmem>>, vector<1x32xf32>
    tpu.vector_store %arg8[%c20, %c0_101], %145 {strides = array<i32>} : memref<32x32xf32, #tpu.memory_space<vmem>>, vector<1x32xf32>,
    %c2_i32_102 = arith.constant 2 : i32
    %147 = arith.muli %arg0, %c2_i32_102 : i32
    %c1_i32_103 = arith.constant 1 : i32
    %148 = arith.addi %147, %c1_i32_103 : i32
    %149 = arith.index_cast %148 : i32 to index
    %c5_104 = arith.constant 5 : index
    %150 = memref.load %arg1[%149, %c5_104] : memref<4x16xi32, #tpu.memory_space<smem>>
    %151 = arith.index_cast %150 : i32 to index
    %c0_105 = arith.constant 0 : index
    %152 = vector.load %arg2[%151, %c0_105] : memref<64x32xf32, #tpu.memory_space<vmem>>, vector<1x32xf32>
    %c21 = arith.constant 21 : index
    %c0_106 = arith.constant 0 : index
    %153 = vector.load %arg8[%c21, %c0_106] : memref<32x32xf32, #tpu.memory_space<vmem>>, vector<1x32xf32>
    tpu.vector_store %arg8[%c21, %c0_106], %152 {strides = array<i32>} : memref<32x32xf32, #tpu.memory_space<vmem>>, vector<1x32xf32>,
    %c2_i32_107 = arith.constant 2 : i32
    %154 = arith.muli %arg0, %c2_i32_107 : i32
    %c1_i32_108 = arith.constant 1 : i32
    %155 = arith.addi %154, %c1_i32_108 : i32
    %156 = arith.index_cast %155 : i32 to index
    %c6_109 = arith.constant 6 : index
    %157 = memref.load %arg1[%156, %c6_109] : memref<4x16xi32, #tpu.memory_space<smem>>
    %158 = arith.index_cast %157 : i32 to index
    %c0_110 = arith.constant 0 : index
    %159 = vector.load %arg2[%158, %c0_110] : memref<64x32xf32, #tpu.memory_space<vmem>>, vector<1x32xf32>
    %c22 = arith.constant 22 : index
    %c0_111 = arith.constant 0 : index
    %160 = vector.load %arg8[%c22, %c0_111] : memref<32x32xf32, #tpu.memory_space<vmem>>, vector<1x32xf32>
    tpu.vector_store %arg8[%c22, %c0_111], %159 {strides = array<i32>} : memref<32x32xf32, #tpu.memory_space<vmem>>, vector<1x32xf32>,
    %c2_i32_112 = arith.constant 2 : i32
    %161 = arith.muli %arg0, %c2_i32_112 : i32
    %c1_i32_113 = arith.constant 1 : i32
    %162 = arith.addi %161, %c1_i32_113 : i32
    %163 = arith.index_cast %162 : i32 to index
    %c7_114 = arith.constant 7 : index
    %164 = memref.load %arg1[%163, %c7_114] : memref<4x16xi32, #tpu.memory_space<smem>>
    %165 = arith.index_cast %164 : i32 to index
    %c0_115 = arith.constant 0 : index
    %166 = vector.load %arg2[%165, %c0_115] : memref<64x32xf32, #tpu.memory_space<vmem>>, vector<1x32xf32>
    %c23 = arith.constant 23 : index
    %c0_116 = arith.constant 0 : index
    %167 = vector.load %arg8[%c23, %c0_116] : memref<32x32xf32, #tpu.memory_space<vmem>>, vector<1x32xf32>
    tpu.vector_store %arg8[%c23, %c0_116], %166 {strides = array<i32>} : memref<32x32xf32, #tpu.memory_space<vmem>>, vector<1x32xf32>,
    %c2_i32_117 = arith.constant 2 : i32
    %168 = arith.muli %arg0, %c2_i32_117 : i32
    %c1_i32_118 = arith.constant 1 : i32
    %169 = arith.addi %168, %c1_i32_118 : i32
    %170 = arith.index_cast %169 : i32 to index
    %c8_119 = arith.constant 8 : index
    %171 = memref.load %arg1[%170, %c8_119] : memref<4x16xi32, #tpu.memory_space<smem>>
    %172 = arith.index_cast %171 : i32 to index
    %c0_120 = arith.constant 0 : index
    %173 = vector.load %arg2[%172, %c0_120] : memref<64x32xf32, #tpu.memory_space<vmem>>, vector<1x32xf32>
    %c24 = arith.constant 24 : index
    %c0_121 = arith.constant 0 : index
    %174 = vector.load %arg8[%c24, %c0_121] : memref<32x32xf32, #tpu.memory_space<vmem>>, vector<1x32xf32>
    tpu.vector_store %arg8[%c24, %c0_121], %173 {strides = array<i32>} : memref<32x32xf32, #tpu.memory_space<vmem>>, vector<1x32xf32>,
    %c2_i32_122 = arith.constant 2 : i32
    %175 = arith.muli %arg0, %c2_i32_122 : i32
    %c1_i32_123 = arith.constant 1 : i32
    %176 = arith.addi %175, %c1_i32_123 : i32
    %177 = arith.index_cast %176 : i32 to index
    %c9_124 = arith.constant 9 : index
    %178 = memref.load %arg1[%177, %c9_124] : memref<4x16xi32, #tpu.memory_space<smem>>
    %179 = arith.index_cast %178 : i32 to index
    %c0_125 = arith.constant 0 : index
    %180 = vector.load %arg2[%179, %c0_125] : memref<64x32xf32, #tpu.memory_space<vmem>>, vector<1x32xf32>
    %c25 = arith.constant 25 : index
    %c0_126 = arith.constant 0 : index
    %181 = vector.load %arg8[%c25, %c0_126] : memref<32x32xf32, #tpu.memory_space<vmem>>, vector<1x32xf32>
    tpu.vector_store %arg8[%c25, %c0_126], %180 {strides = array<i32>} : memref<32x32xf32, #tpu.memory_space<vmem>>, vector<1x32xf32>,
    %c2_i32_127 = arith.constant 2 : i32
    %182 = arith.muli %arg0, %c2_i32_127 : i32
    %c1_i32_128 = arith.constant 1 : i32
    %183 = arith.addi %182, %c1_i32_128 : i32
    %184 = arith.index_cast %183 : i32 to index
    %c10_129 = arith.constant 10 : index
    %185 = memref.load %arg1[%184, %c10_129] : memref<4x16xi32, #tpu.memory_space<smem>>
    %186 = arith.index_cast %185 : i32 to index
    %c0_130 = arith.constant 0 : index
    %187 = vector.load %arg2[%186, %c0_130] : memref<64x32xf32, #tpu.memory_space<vmem>>, vector<1x32xf32>
    %c26 = arith.constant 26 : index
    %c0_131 = arith.constant 0 : index
    %188 = vector.load %arg8[%c26, %c0_131] : memref<32x32xf32, #tpu.memory_space<vmem>>, vector<1x32xf32>
    tpu.vector_store %arg8[%c26, %c0_131], %187 {strides = array<i32>} : memref<32x32xf32, #tpu.memory_space<vmem>>, vector<1x32xf32>,
    %c2_i32_132 = arith.constant 2 : i32
    %189 = arith.muli %arg0, %c2_i32_132 : i32
    %c1_i32_133 = arith.constant 1 : i32
    %190 = arith.addi %189, %c1_i32_133 : i32
    %191 = arith.index_cast %190 : i32 to index
    %c11_134 = arith.constant 11 : index
    %192 = memref.load %arg1[%191, %c11_134] : memref<4x16xi32, #tpu.memory_space<smem>>
    %193 = arith.index_cast %192 : i32 to index
    %c0_135 = arith.constant 0 : index
    %194 = vector.load %arg2[%193, %c0_135] : memref<64x32xf32, #tpu.memory_space<vmem>>, vector<1x32xf32>
    %c27 = arith.constant 27 : index
    %c0_136 = arith.constant 0 : index
    %195 = vector.load %arg8[%c27, %c0_136] : memref<32x32xf32, #tpu.memory_space<vmem>>, vector<1x32xf32>
    tpu.vector_store %arg8[%c27, %c0_136], %194 {strides = array<i32>} : memref<32x32xf32, #tpu.memory_space<vmem>>, vector<1x32xf32>,
    %c2_i32_137 = arith.constant 2 : i32
    %196 = arith.muli %arg0, %c2_i32_137 : i32
    %c1_i32_138 = arith.constant 1 : i32
    %197 = arith.addi %196, %c1_i32_138 : i32
    %198 = arith.index_cast %197 : i32 to index
    %c12_139 = arith.constant 12 : index
    %199 = memref.load %arg1[%198, %c12_139] : memref<4x16xi32, #tpu.memory_space<smem>>
    %200 = arith.index_cast %199 : i32 to index
    %c0_140 = arith.constant 0 : index
    %201 = vector.load %arg2[%200, %c0_140] : memref<64x32xf32, #tpu.memory_space<vmem>>, vector<1x32xf32>
    %c28 = arith.constant 28 : index
    %c0_141 = arith.constant 0 : index
    %202 = vector.load %arg8[%c28, %c0_141] : memref<32x32xf32, #tpu.memory_space<vmem>>, vector<1x32xf32>
    tpu.vector_store %arg8[%c28, %c0_141], %201 {strides = array<i32>} : memref<32x32xf32, #tpu.memory_space<vmem>>, vector<1x32xf32>,
    %c2_i32_142 = arith.constant 2 : i32
    %203 = arith.muli %arg0, %c2_i32_142 : i32
    %c1_i32_143 = arith.constant 1 : i32
    %204 = arith.addi %203, %c1_i32_143 : i32
    %205 = arith.index_cast %204 : i32 to index
    %c13_144 = arith.constant 13 : index
    %206 = memref.load %arg1[%205, %c13_144] : memref<4x16xi32, #tpu.memory_space<smem>>
    %207 = arith.index_cast %206 : i32 to index
    %c0_145 = arith.constant 0 : index
    %208 = vector.load %arg2[%207, %c0_145] : memref<64x32xf32, #tpu.memory_space<vmem>>, vector<1x32xf32>
    %c29 = arith.constant 29 : index
    %c0_146 = arith.constant 0 : index
    %209 = vector.load %arg8[%c29, %c0_146] : memref<32x32xf32, #tpu.memory_space<vmem>>, vector<1x32xf32>
    tpu.vector_store %arg8[%c29, %c0_146], %208 {strides = array<i32>} : memref<32x32xf32, #tpu.memory_space<vmem>>, vector<1x32xf32>,
    %c2_i32_147 = arith.constant 2 : i32
    %210 = arith.muli %arg0, %c2_i32_147 : i32
    %c1_i32_148 = arith.constant 1 : i32
    %211 = arith.addi %210, %c1_i32_148 : i32
    %212 = arith.index_cast %211 : i32 to index
    %c14_149 = arith.constant 14 : index
    %213 = memref.load %arg1[%212, %c14_149] : memref<4x16xi32, #tpu.memory_space<smem>>
    %214 = arith.index_cast %213 : i32 to index
    %c0_150 = arith.constant 0 : index
    %215 = vector.load %arg2[%214, %c0_150] : memref<64x32xf32, #tpu.memory_space<vmem>>, vector<1x32xf32>
    %c30 = arith.constant 30 : index
    %c0_151 = arith.constant 0 : index
    %216 = vector.load %arg8[%c30, %c0_151] : memref<32x32xf32, #tpu.memory_space<vmem>>, vector<1x32xf32>
    tpu.vector_store %arg8[%c30, %c0_151], %215 {strides = array<i32>} : memref<32x32xf32, #tpu.memory_space<vmem>>, vector<1x32xf32>,
    %c2_i32_152 = arith.constant 2 : i32
    %217 = arith.muli %arg0, %c2_i32_152 : i32
    %c1_i32_153 = arith.constant 1 : i32
    %218 = arith.addi %217, %c1_i32_153 : i32
    %219 = arith.index_cast %218 : i32 to index
    %c15_154 = arith.constant 15 : index
    %220 = memref.load %arg1[%219, %c15_154] : memref<4x16xi32, #tpu.memory_space<smem>>
    %221 = arith.index_cast %220 : i32 to index
    %c0_155 = arith.constant 0 : index
    %222 = vector.load %arg2[%221, %c0_155] : memref<64x32xf32, #tpu.memory_space<vmem>>, vector<1x32xf32>
    %c31 = arith.constant 31 : index
    %c0_156 = arith.constant 0 : index
    %223 = vector.load %arg8[%c31, %c0_156] : memref<32x32xf32, #tpu.memory_space<vmem>>, vector<1x32xf32>
    tpu.vector_store %arg8[%c31, %c0_156], %222 {strides = array<i32>} : memref<32x32xf32, #tpu.memory_space<vmem>>, vector<1x32xf32>,
    %c0_157 = arith.constant 0 : index
    %c0_158 = arith.constant 0 : index
    %224 = vector.load %arg8[%c0_157, %c0_158] : memref<32x32xf32, #tpu.memory_space<vmem>>, vector<32x32xf32>
    %225 = arith.truncf %224 : vector<32x32xf32> to vector<32x32xbf16>
    %c0_159 = arith.constant 0 : index
    %c0_160 = arith.constant 0 : index
    %226 = vector.load %arg3[%c0_159, %c0_160] : memref<32x384xbf16, #tpu.memory_space<vmem>>, vector<32x384xbf16>
    %cst = arith.constant dense<0.000000e+00> : vector<32x384xf32>
    %227 = tpu.matmul %225, %226, %cst {dimension_numbers = #tpu.dot_dimension_numbers<[1], [0], [0], [1], [0, 0, 1, 1], [], []>} : vector<32x32xbf16>, vector<32x384xbf16>, vector<32x384xf32> -> vector<32x384xf32>
    %228 = vector.shape_cast %227 : vector<32x384xf32> to vector<2x16x384xf32>
    %229 = vector.extract_strided_slice %228 {offsets = [0, 0, 0], sizes = [2, 14, 32], strides = [1, 1, 1]} : vector<2x16x384xf32> to vector<2x14x32xf32>
    %230 = vector.extract_strided_slice %228 {offsets = [0, 1, 32], sizes = [2, 14, 32], strides = [1, 1, 1]} : vector<2x16x384xf32> to vector<2x14x32xf32>
    %231 = arith.addf %229, %230 : vector<2x14x32xf32>
    %232 = vector.extract_strided_slice %228 {offsets = [0, 2, 64], sizes = [2, 14, 32], strides = [1, 1, 1]} : vector<2x16x384xf32> to vector<2x14x32xf32>
    %233 = arith.addf %231, %232 : vector<2x14x32xf32>
    %cst_161 = arith.constant dense<0xFF800000> : vector<2x32xf32>
    %234 = vector.multi_reduction <maximumf>, %233, %cst_161 [1] : vector<2x14x32xf32> to vector<2x32xf32>
    %235 = vector.extract_strided_slice %228 {offsets = [0, 0, 96], sizes = [2, 13, 32], strides = [1, 1, 1]} : vector<2x16x384xf32> to vector<2x13x32xf32>
    %236 = vector.extract_strided_slice %228 {offsets = [0, 1, 128], sizes = [2, 13, 32], strides = [1, 1, 1]} : vector<2x16x384xf32> to vector<2x13x32xf32>
    %237 = arith.addf %235, %236 : vector<2x13x32xf32>
    %238 = vector.extract_strided_slice %228 {offsets = [0, 2, 160], sizes = [2, 13, 32], strides = [1, 1, 1]} : vector<2x16x384xf32> to vector<2x13x32xf32>
    %239 = arith.addf %237, %238 : vector<2x13x32xf32>
    %240 = vector.extract_strided_slice %228 {offsets = [0, 3, 192], sizes = [2, 13, 32], strides = [1, 1, 1]} : vector<2x16x384xf32> to vector<2x13x32xf32>
    %241 = arith.addf %239, %240 : vector<2x13x32xf32>
    %cst_162 = arith.constant dense<0xFF800000> : vector<2x32xf32>
    %242 = vector.multi_reduction <maximumf>, %241, %cst_162 [1] : vector<2x13x32xf32> to vector<2x32xf32>
    %243 = vector.extract_strided_slice %228 {offsets = [0, 0, 224], sizes = [2, 12, 32], strides = [1, 1, 1]} : vector<2x16x384xf32> to vector<2x12x32xf32>
    %244 = vector.extract_strided_slice %228 {offsets = [0, 1, 256], sizes = [2, 12, 32], strides = [1, 1, 1]} : vector<2x16x384xf32> to vector<2x12x32xf32>
    %245 = arith.addf %243, %244 : vector<2x12x32xf32>
    %246 = vector.extract_strided_slice %228 {offsets = [0, 2, 288], sizes = [2, 12, 32], strides = [1, 1, 1]} : vector<2x16x384xf32> to vector<2x12x32xf32>
    %247 = arith.addf %245, %246 : vector<2x12x32xf32>
    %248 = vector.extract_strided_slice %228 {offsets = [0, 3, 320], sizes = [2, 12, 32], strides = [1, 1, 1]} : vector<2x16x384xf32> to vector<2x12x32xf32>
    %249 = arith.addf %247, %248 : vector<2x12x32xf32>
    %250 = vector.extract_strided_slice %228 {offsets = [0, 4, 352], sizes = [2, 12, 32], strides = [1, 1, 1]} : vector<2x16x384xf32> to vector<2x12x32xf32>
    %251 = arith.addf %249, %250 : vector<2x12x32xf32>
    %cst_163 = arith.constant dense<0xFF800000> : vector<2x32xf32>
    %252 = vector.multi_reduction <maximumf>, %251, %cst_163 [1] : vector<2x12x32xf32> to vector<2x32xf32>
    %253 = tpu.concatenate %234, %242, %252 in 1 : vector<2x32xf32>, vector<2x32xf32>, vector<2x32xf32> -> vector<2x96xf32>
    %c0_164 = arith.constant 0 : index
    %c0_165 = arith.constant 0 : index
    %254 = vector.load %arg4[%c0_164, %c0_165] : memref<1x96xf32, #tpu.memory_space<vmem>>, vector<1x96xf32>
    %255 = vector.broadcast %254 : vector<1x96xf32> to vector<2x96xf32>
    %256 = arith.addf %253, %255 : vector<2x96xf32>
    %cst_166 = arith.constant 0.000000e+00 : f32
    %257 = vector.broadcast %cst_166 : f32 to vector<2x96xf32>
    %258 = arith.maximumf %256, %257 : vector<2x96xf32>
    %c0_167 = arith.constant 0 : index
    %c0_168 = arith.constant 0 : index
    %259 = vector.load %arg5[%c0_167, %c0_168] : memref<96x128xf32, #tpu.memory_space<vmem>>, vector<96x128xf32>
    %cst_169 = arith.constant dense<0.000000e+00> : vector<2x128xf32>
    %260 = tpu.matmul %258, %259, %cst_169 {dimension_numbers = #tpu.dot_dimension_numbers<[1], [0], [0], [1], [0, 0, 1, 1], [], []>} : vector<2x96xf32>, vector<96x128xf32>, vector<2x128xf32> -> vector<2x128xf32>
    %c0_170 = arith.constant 0 : index
    %c0_171 = arith.constant 0 : index
    %261 = vector.load %arg6[%c0_170, %c0_171] : memref<1x128xf32, #tpu.memory_space<vmem>>, vector<1x128xf32>
    %262 = vector.broadcast %261 : vector<1x128xf32> to vector<2x128xf32>
    %263 = arith.addf %260, %262 : vector<2x128xf32>
    %cst_172 = arith.constant dense<0xFF800000> : vector<2xf32>
    %264 = vector.multi_reduction <maximumf>, %263, %cst_172 [1] : vector<2x128xf32> to vector<2xf32>
    %265 = vector.shape_cast %264 : vector<2xf32> to vector<2x1xf32>
    %266 = vector.broadcast %265 : vector<2x1xf32> to vector<2x128xf32>
    %267 = arith.subf %263, %266 : vector<2x128xf32>
    %268 = math.exp %267 : vector<2x128xf32>
    %cst_173 = arith.constant dense<0.000000e+00> : vector<2xf32>
    %269 = vector.multi_reduction <add>, %268, %cst_173 [1] : vector<2x128xf32> to vector<2xf32>
    %270 = vector.shape_cast %269 : vector<2xf32> to vector<2x1xf32>
    %271 = vector.broadcast %270 : vector<2x1xf32> to vector<2x128xf32>
    %272 = arith.divf %268, %271 : vector<2x128xf32>
    %c0_174 = arith.constant 0 : index
    %c0_175 = arith.constant 0 : index
    %c0_176 = arith.constant 0 : index
    %273 = vector.load %arg7[%c0_174, %c0_175, %c0_176] : memref<1x2x128xf32, #tpu.memory_space<vmem>>, vector<1x2x128xf32>
    %274 = vector.shape_cast %273 : vector<1x2x128xf32> to vector<2x128xf32>
    %275 = vector.shape_cast %272 : vector<2x128xf32> to vector<1x2x128xf32>
    tpu.vector_store %arg7[%c0_174, %c0_175, %c0_176], %275 {strides = array<i32>} : memref<1x2x128xf32, #tpu.memory_space<vmem>>, vector<1x2x128xf32>,
    return
  }
  func.func @transform_0(%arg0: i32, %arg1: memref<4x16xi32, #tpu.memory_space<smem>>) -> (i32, i32) {
    %c0_i32 = arith.constant 0 : i32
    %c0_i32_0 = arith.constant 0 : i32
    %c0_i32_1 = arith.constant 0 : i32
    return %c0_i32, %c0_i32_0 : i32, i32
  }
  func.func @transform_1(%arg0: i32, %arg1: memref<4x16xi32, #tpu.memory_space<smem>>) -> (i32, i32) {
    %c0_i32 = arith.constant 0 : i32
    %c0_i32_0 = arith.constant 0 : i32
    %c0_i32_1 = arith.constant 0 : i32
    return %c0_i32, %c0_i32_0 : i32, i32
  }
  func.func @transform_2(%arg0: i32, %arg1: memref<4x16xi32, #tpu.memory_space<smem>>) -> (i32, i32) {
    %c0_i32 = arith.constant 0 : i32
    %c0_i32_0 = arith.constant 0 : i32
    %c0_i32_1 = arith.constant 0 : i32
    return %c0_i32, %c0_i32_0 : i32, i32
  }
  func.func @transform_3(%arg0: i32, %arg1: memref<4x16xi32, #tpu.memory_space<smem>>) -> (i32, i32) {
    %c0_i32 = arith.constant 0 : i32
    %c0_i32_0 = arith.constant 0 : i32
    %c0_i32_1 = arith.constant 0 : i32
    return %c0_i32, %c0_i32_0 : i32, i32
  }
  func.func @transform_4(%arg0: i32, %arg1: memref<4x16xi32, #tpu.memory_space<smem>>) -> (i32, i32) {
    %c0_i32 = arith.constant 0 : i32
    %c0_i32_0 = arith.constant 0 : i32
    %c0_i32_1 = arith.constant 0 : i32
    return %c0_i32, %c0_i32_0 : i32, i32
  }
  func.func @transform_5(%arg0: i32, %arg1: memref<4x16xi32, #tpu.memory_space<smem>>) -> (i32, i32, i32) {
    %c0_i32 = arith.constant 0 : i32
    %c0_i32_0 = arith.constant 0 : i32
    %c0_i32_1 = arith.constant 0 : i32
    return %arg0, %c0_i32, %c0_i32_0 : i32, i32, i32
  }
}

</mosaic_0001>

<llo_original>
// kernel: textcnn_forward.1
$region0: #{textcnn_forward.1}
  #allocation0 [shape = 'u32[]', space=smem, size = 0x4, offset = 0x4, fixed_abs, tag = 'smem constant byte address 0x4 - core index']
  #allocation1 [shape = 'u32[144,128]{1,0:T(1,128)}', space=vmem, size = 0x12000, scoped, tag = 'internal scratch']
  #allocation2 [shape = 'f32[32,32]{1,0:T(8,128)}', space=vmem, size = 0x4000, scoped, tag = 'scratch operand']
  #allocation3 [shape = 's32[1]{0}', space=sflag, size = 0x4, scoped, tag = 'scoped memory for textcnn_forward.1']
  #allocation4 [shape = 'u8[2048]{0}', space=smem, size = 0x800, scoped, tag = 'prefetched SMEM operand 0']
  %s0 = inlined_call_operand.vmem [shape: s32[4,16], index: 0, kind: input, shape index: {}]
  %s1 = inlined_call_operand.vmem [shape: f32[64,32], index: 1, kind: input, shape index: {}]
  %s2 = inlined_call_operand.hbm [shape: bf16[32,384], index: 2, kind: input, shape index: {}]
  %s3 = inlined_call_operand.vmem [shape: f32[1,96], index: 3, kind: input, shape index: {}]
  %s4 = inlined_call_operand.vmem [shape: f32[96,128], index: 4, kind: input, shape index: {}]
  %s5 = inlined_call_operand.vmem [shape: f32[1,128], index: 5, kind: input, shape index: {}]
  %s6 = inlined_call_operand.vmem [shape: f32[2,2,128], index: 6, kind: output, shape index: {}]
  %s7 = sld [smem:[#allocation0]]
  $region57: #{textcnn_forward.1} parent=0
    _
  %s9 = ssub.s32 1, %s7
  %s10 = scalar_select 0, %s9, %s7
  %s11 = sshll.u32 %s0, 4
  %s12 = int_to_ptr.vmem [resolvable:$true] %s11
  %14 = dma.vmem_to_smem %s12, 64, [#allocation4], [#allocation3]
  %15 = dma.done [#allocation3], 64
  %16 = sfence
  $region1: #{textcnn_forward.1} parent=0
    #allocation5 [shape = 'u8[24576]{0}', space=vmem, size = 0x6000, scoped, tag = 'input window, operand 2, single buffered']
    #allocation6 [shape = 's32[2]{0}', space=sflag, size = 0x8, scoped, tag = 'scoped memory for textcnn_forward.1']
    %17 = vsyncpa [#allocation6], 0
    loop: start=0, step=1, limit=4
    $region2: #{textcnn_forward.1} parent=1 // loop_pre_header
      _
    $region3: #{textcnn_forward.1} parent=1 // loop_header
      %s19 = sphi 0, %s23
      %p20 = scmp.ge.s32.totalorder %s19, 4
      %s27 = sphi 0, %s27
      %s29 = sphi 0, %s27
      %s30 = sphi 0, %s29
      %s44 = sphi 0, %s30
      %s48 = sphi 0, %s48
      %s50 = sphi 0, %s48
      %s51 = sphi 0, %s50
      %s65 = sphi 0, %s51
      %s69 = sphi 0, %s69
      %s71 = sphi 0, %s69
      %s72 = sphi 0, %s71
      %s86 = sphi 0, %s72
      %s90 = sphi 0, %s90
      %s92 = sphi 0, %s90
      %s93 = sphi 0, %s92
      %s107 = sphi 0, %s93
      %s111 = sphi 0, %s111
      %s113 = sphi 0, %s111
      %s114 = sphi 0, %s113
      %s128 = sphi 0, %s114
      %s134 = sphi 0, %s136
      %s137 = sphi 0, %s134
      %s138 = sphi 0, %s137
      %s154 = sphi 0, %s138
    $region4: #{textcnn_forward.1} parent=1 // loop_header_branch
      %22 = sbr.rel (%p20) target = $region8
    $region5: #{textcnn_forward.1} parent=1 // loop_body
      %s24 = ssub.s32 %s19, 1
      %s25 = ssub.s32 %s19, 2
      %s26 = sadd.s32 %s19, 1
      %s28 = sadd.s32 %s27, 1
      %p31 = scmp.eq.s32.totalorder %s19, 1
      %p32 = scmp.ne.s32.totalorder %s27, %s29
      %p33 = scmp.eq.s32.totalorder %s19, 0
      %p34 = por %p32, %p33
      %p35 = scmp.ne.s32.totalorder %s27, %s29
      %p36 = scmp.eq.s32.totalorder %s24, 1
      %p37 = por %p35, %p36
      %p38 = scmp.ne.s32.totalorder %s29, %s30
      %p39 = scmp.eq.s32.totalorder %s24, 0
      %p40 = por %p38, %p39
      %p41 = scmp.ne.s32.totalorder %s29, %s30
      %p42 = scmp.eq.s32.totalorder %s25, 1
      %p43 = por %p41, %p42
      %p45 = scmp.ne.s32.totalorder %s30, %s44
      %p46 = scmp.eq.s32.totalorder %s25, 0
      %p47 = por %p45, %p46
      %s49 = sadd.s32 %s48, 1
      %p52 = scmp.eq.s32.totalorder %s19, 1
      %p53 = scmp.ne.s32.totalorder %s48, %s50
      %p54 = scmp.eq.s32.totalorder %s19, 0
      %p55 = por %p53, %p54
      %p56 = scmp.ne.s32.totalorder %s48, %s50
      %p57 = scmp.eq.s32.totalorder %s24, 1
      %p58 = por %p56, %p57
      %p59 = scmp.ne.s32.totalorder %s50, %s51
      %p60 = scmp.eq.s32.totalorder %s24, 0
      %p61 = por %p59, %p60
      %p62 = scmp.ne.s32.totalorder %s50, %s51
      %p63 = scmp.eq.s32.totalorder %s25, 1
      %p64 = por %p62, %p63
      %p66 = scmp.ne.s32.totalorder %s51, %s65
      %p67 = scmp.eq.s32.totalorder %s25, 0
      %p68 = por %p66, %p67
      %s70 = sadd.s32 %s69, 1
      %p73 = scmp.eq.s32.totalorder %s19, 1
      %p74 = scmp.ne.s32.totalorder %s69, %s71
      %p75 = scmp.eq.s32.totalorder %s19, 0
      %p76 = por %p74, %p75
      %p77 = scmp.ne.s32.totalorder %s69, %s71
      %p78 = scmp.eq.s32.totalorder %s24, 1
      %p79 = por %p77, %p78
      %p80 = scmp.ne.s32.totalorder %s71, %s72
      %p81 = scmp.eq.s32.totalorder %s24, 0
      %p82 = por %p80, %p81
      %p83 = scmp.ne.s32.totalorder %s71, %s72
      %p84 = scmp.eq.s32.totalorder %s25, 1
      %p85 = por %p83, %p84
      %p87 = scmp.ne.s32.totalorder %s72, %s86
      %p88 = scmp.eq.s32.totalorder %s25, 0
      %p89 = por %p87, %p88
      %s91 = sadd.s32 %s90, 1
      %p94 = scmp.eq.s32.totalorder %s19, 1
      %p95 = scmp.ne.s32.totalorder %s90, %s92
      %p96 = scmp.eq.s32.totalorder %s19, 0
      %p97 = por %p95, %p96
      %p98 = scmp.ne.s32.totalorder %s90, %s92
      %p99 = scmp.eq.s32.totalorder %s24, 1
      %p100 = por %p98, %p99
      %p101 = scmp.ne.s32.totalorder %s92, %s93
      %p102 = scmp.eq.s32.totalorder %s24, 0
      %p103 = por %p101, %p102
      %p104 = scmp.ne.s32.totalorder %s92, %s93
      %p105 = scmp.eq.s32.totalorder %s25, 1
      %p106 = por %p104, %p105
      %p108 = scmp.ne.s32.totalorder %s93, %s107
      %p109 = scmp.eq.s32.totalorder %s25, 0
      %p110 = por %p108, %p109
      %s112 = sadd.s32 %s111, 1
      %p115 = scmp.eq.s32.totalorder %s19, 1
      %p116 = scmp.ne.s32.totalorder %s111, %s113
      %p117 = scmp.eq.s32.totalorder %s19, 0
      %p118 = por %p116, %p117
      %p119 = scmp.ne.s32.totalorder %s111, %s113
      %p120 = scmp.eq.s32.totalorder %s24, 1
      %p121 = por %p119, %p120
      %p122 = scmp.ne.s32.totalorder %s113, %s114
      %p123 = scmp.eq.s32.totalorder %s24, 0
      %p124 = por %p122, %p123
      %p125 = scmp.ne.s32.totalorder %s113, %s114
      %p126 = scmp.eq.s32.totalorder %s25, 1
      %p127 = por %p125, %p126
      %p129 = scmp.ne.s32.totalorder %s114, %s128
      %p130 = scmp.eq.s32.totalorder %s25, 0
      %p131 = por %p129, %p130
      %s132 = ssub.s32 %s19, %s26
      %p133 = scmp.eq.s32.totalorder %s132, 0
      %s135 = sadd.s32 %s134, 1
      %s136 = scalar_select %p133, %s134, %s135
      %p139 = pneg %p133
      %p140 = scmp.eq.s32.totalorder %s19, 1
      %p141 = por %p139, %p140
      %p142 = scmp.ne.s32.totalorder %s134, %s137
      %p143 = scmp.eq.s32.totalorder %s19, 0
      %p144 = por %p142, %p143
      %p145 = scmp.ne.s32.totalorder %s134, %s137
      %p146 = scmp.eq.s32.totalorder %s24, 1
      %p147 = por %p145, %p146
      %p148 = scmp.ne.s32.totalorder %s137, %s138
      %p149 = scmp.eq.s32.totalorder %s24, 0
      %p150 = por %p148, %p149
      %p151 = scmp.ne.s32.totalorder %s137, %s138
      %p152 = scmp.eq.s32.totalorder %s25, 1
      %p153 = por %p151, %p152
      %p155 = scmp.ne.s32.totalorder %s138, %s154
      %p156 = scmp.eq.s32.totalorder %s25, 0
      %p157 = por %p155, %p156
      %p158 = scmp.le.s32.totalorder 1, %s19
      %p159 = scmp.lt.s32.totalorder %s19, 3
      %p160 = pnand %p158, %p159
      %p161 = pneg %p160
      // Predicated region
      $region9: #{textcnn_forward.1} parent=5 // pred_check
        _
      $region10: #{textcnn_forward.1} parent=5 // pred_check_branch
        %163 = sbr.rel (%p160) target = $region12
      $region11: #{textcnn_forward.1} parent=5 // pred_region
        %s164 = ssub.s32 %s19, 1
        // Predicated region
        $region13: #{textcnn_forward.1} parent=11 // pred_check
          %p165 = pneg %p40
        $region14: #{textcnn_forward.1} parent=11 // pred_check_branch
          %167 = sbr.rel (%p165) target = $region16
        $region15: #{textcnn_forward.1} parent=11 // pred_region
          _
        $region16: #{textcnn_forward.1} parent=11 // pred_fallthru
          _
        // Predicated region
        $region17: #{textcnn_forward.1} parent=11 // pred_check
          %p168 = pneg %p61
        $region18: #{textcnn_forward.1} parent=11 // pred_check_branch
          %170 = sbr.rel (%p168) target = $region20
        $region19: #{textcnn_forward.1} parent=11 // pred_region
          %s172 = ssub.s32 768, 768
          %173 = vsyncadd [#allocation6], %s172
          %s174 = sshll.u32 [#allocation5], 4
          %s175 = int_to_ptr.vmem [resolvable:$true] %s174
          %180 = dma.hbm_to_vmem [thread:$0]  %s2, 768, %s175, [#allocation6], 192, 192, 12
        $region20: #{textcnn_forward.1} parent=11 // pred_fallthru
          _
        // Predicated region
        $region21: #{textcnn_forward.1} parent=11 // pred_check
          %p181 = pneg %p82
        $region22: #{textcnn_forward.1} parent=11 // pred_check_branch
          %183 = sbr.rel (%p181) target = $region24
        $region23: #{textcnn_forward.1} parent=11 // pred_region
          _
        $region24: #{textcnn_forward.1} parent=11 // pred_fallthru
          _
        // Predicated region
        $region25: #{textcnn_forward.1} parent=11 // pred_check
          %p184 = pneg %p103
        $region26: #{textcnn_forward.1} parent=11 // pred_check_branch
          %186 = sbr.rel (%p184) target = $region28
        $region27: #{textcnn_forward.1} parent=11 // pred_region
          _
        $region28: #{textcnn_forward.1} parent=11 // pred_fallthru
          _
        // Predicated region
        $region29: #{textcnn_forward.1} parent=11 // pred_check
          %p187 = pneg %p124
        $region30: #{textcnn_forward.1} parent=11 // pred_check_branch
          %189 = sbr.rel (%p187) target = $region32
        $region31: #{textcnn_forward.1} parent=11 // pred_region
          _
        $region32: #{textcnn_forward.1} parent=11 // pred_fallthru
          _
      $region12: #{textcnn_forward.1} parent=5 // pred_fallthru
        _
      %p190 = scmp.lt.s32.totalorder %s19, 2
      // Predicated region
      $region33: #{textcnn_forward.1} parent=5 // pred_check
        %p191 = pneg %p190
      $region34: #{textcnn_forward.1} parent=5 // pred_check_branch
        %193 = sbr.rel (%p191) target = $region36
      $region35: #{textcnn_forward.1} parent=5 // pred_region
        _
      $region36: #{textcnn_forward.1} parent=5 // pred_fallthru
        _
      %p194 = scmp.le.s32.totalorder 1, %s19
      %p195 = scmp.lt.s32.totalorder %s19, 3
      %p196 = pnand %p194, %p195
      %p197 = pneg %p196
      // Predicated region
      $region37: #{textcnn_forward.1} parent=5 // pred_check
        _
      $region38: #{textcnn_forward.1} parent=5 // pred_check_branch
        %199 = sbr.rel (%p196) target = $region40
      $region39: #{textcnn_forward.1} parent=5 // pred_region
        %s200 = ssub.s32 %s19, 1
        // Predicated region
        $region41: #{textcnn_forward.1} parent=39 // pred_check
          %p201 = pneg %p61
        $region42: #{textcnn_forward.1} parent=39 // pred_check_branch
          %203 = sbr.rel (%p201) target = $region44
        $region43: #{textcnn_forward.1} parent=39 // pred_region
          %204 = dma.done [#allocation6], 768
        $region44: #{textcnn_forward.1} parent=39 // pred_fallthru
          _
        %p205 = pneg %p40
        %p206 = pneg %p37
        %p207 = pneg %p61
        %p208 = pneg %p58
        %p209 = pneg %p82
        %p210 = pneg %p79
        %p211 = pneg %p103
        %p212 = pneg %p100
        %p213 = pneg %p124
        %p214 = pneg %p121
        %p215 = pneg %p150
        %p216 = pneg %p147
        %p217 = scmp.lt.s32.totalorder %s24, 1
        %s218 = scalar_select %p217, %s24, 1
        %s219 = smul.addr %s218, 2
        %s220 = scalar_lea.vmem %s6, %s219
        %p221 = scmp.lt.s32.totalorder %s24, 1
        %s222 = scalar_select %p221, %s24, 1
        %s223 = smul.addr %s222, 2
        %s224 = scalar_lea.vmem %s6, %s223
        %s226 = smul.u32 %s24, 2
        %s227 = smul.u32 %s226, 128
        %s228 = sld [smem:[#allocation4 + %s227]]
        %s229 = scalar_lea.vmem %s1, %s228
        %v230 = vld [vmem:[%s229] sm:$0x1]
        %vm231 = vcmask 253952
        %232 = vst.msk [vmem:[#allocation2] sm:$0x1] %vm231, %v230
        %s233 = sadd.s32 %s227, 1
        %s234 = sld [smem:[#allocation4 + %s233]]
        %s235 = scalar_lea.vmem %s1, %s234
        %v236 = vld [vmem:[%s235] sm:$0x1]
        %237 = vst.msk [vmem:[#allocation2 + $0x1] sm:$0x1] %vm231, %v236
        %s238 = sadd.s32 %s227, 2
        %s239 = sld [smem:[#allocation4 + %s238]]
        %s240 = scalar_lea.vmem %s1, %s239
        %v241 = vld [vmem:[%s240] sm:$0x1]
        %242 = vst.msk [vmem:[#allocation2 + $0x2] sm:$0x1] %vm231, %v241
        %s243 = sadd.s32 %s227, 3
        %s244 = sld [smem:[#allocation4 + %s243]]
        %s245 = scalar_lea.vmem %s1, %s244
        %v246 = vld [vmem:[%s245] sm:$0x1]
        %247 = vst.msk [vmem:[#allocation2 + $0x3] sm:$0x1] %vm231, %v246
        %s248 = sadd.s32 %s227, 4
        %s249 = sld [smem:[#allocation4 + %s248]]
        %s250 = scalar_lea.vmem %s1, %s249
        %v251 = vld [vmem:[%s250] sm:$0x1]
        %252 = vst.msk [vmem:[#allocation2 + $0x4] sm:$0x1] %vm231, %v251
        %s253 = sadd.s32 %s227, 5
        %s254 = sld [smem:[#allocation4 + %s253]]
        %s255 = scalar_lea.vmem %s1, %s254
        %v256 = vld [vmem:[%s255] sm:$0x1]
        %257 = vst.msk [vmem:[#allocation2 + $0x5] sm:$0x1] %vm231, %v256
        %s258 = sadd.s32 %s227, 6
        %s259 = sld [smem:[#allocation4 + %s258]]
        %s260 = scalar_lea.vmem %s1, %s259
        %v261 = vld [vmem:[%s260] sm:$0x1]
        %262 = vst.msk [vmem:[#allocation2 + $0x6] sm:$0x1] %vm231, %v261
        %s263 = sadd.s32 %s227, 7
        %s264 = sld [smem:[#allocation4 + %s263]]
        %s265 = scalar_lea.vmem %s1, %s264
        %v266 = vld [vmem:[%s265] sm:$0x1]
        %267 = vst.msk [vmem:[#allocation2 + $0x7] sm:$0x1] %vm231, %v266
        %s268 = sadd.s32 %s227, 8
        %s269 = sld [smem:[#allocation4 + %s268]]
        %s270 = scalar_lea.vmem %s1, %s269
        %v271 = vld [vmem:[%s270] sm:$0x1]
        %272 = vst.msk [vmem:[#allocation2 + $0x8] sm:$0x1] %vm231, %v271
        %s273 = sadd.s32 %s227, 9
        %s274 = sld [smem:[#allocation4 + %s273]]
        %s275 = scalar_lea.vmem %s1, %s274
        %v276 = vld [vmem:[%s275] sm:$0x1]
        %277 = vst.msk [vmem:[#allocation2 + $0x9] sm:$0x1] %vm231, %v276
        %s278 = sadd.s32 %s227, 10
        %s279 = sld [smem:[#allocation4 + %s278]]
        %s280 = scalar_lea.vmem %s1, %s279
        %v281 = vld [vmem:[%s280] sm:$0x1]
        %282 = vst.msk [vmem:[#allocation2 + $0xa] sm:$0x1] %vm231, %v281
        %s283 = sadd.s32 %s227, 11
        %s284 = sld [smem:[#allocation4 + %s283]]
        %s285 = scalar_lea.vmem %s1, %s284
        %v286 = vld [vmem:[%s285] sm:$0x1]
        %287 = vst.msk [vmem:[#allocation2 + $0xb] sm:$0x1] %vm231, %v286
        %s288 = sadd.s32 %s227, 12
        %s289 = sld [smem:[#allocation4 + %s288]]
        %s290 = scalar_lea.vmem %s1, %s289
        %v291 = vld [vmem:[%s290] sm:$0x1]
        %292 = vst.msk [vmem:[#allocation2 + $0xc] sm:$0x1] %vm231, %v291
        %s293 = sadd.s32 %s227, 13
        %s294 = sld [smem:[#allocation4 + %s293]]
        %s295 = scalar_lea.vmem %s1, %s294
        %v296 = vld [vmem:[%s295] sm:$0x1]
        %297 = vst.msk [vmem:[#allocation2 + $0xd] sm:$0x1] %vm231, %v296
        %s298 = sadd.s32 %s227, 14
        %s299 = sld [smem:[#allocation4 + %s298]]
        %s300 = scalar_lea.vmem %s1, %s299
        %v301 = vld [vmem:[%s300] sm:$0x1]
        %302 = vst.msk [vmem:[#allocation2 + $0xe] sm:$0x1] %vm231, %v301
        %s303 = sadd.s32 %s227, 15
        %s304 = sld [smem:[#allocation4 + %s303]]
        %s305 = scalar_lea.vmem %s1, %s304
        %v306 = vld [vmem:[%s305] sm:$0x1]
        %307 = vst.msk [vmem:[#allocation2 + $0xf] sm:$0x1] %vm231, %v306
        %s308 = sadd.s32 %s226, 1
        %s309 = smul.u32 %s308, 128
        %s310 = sld [smem:[#allocation4 + %s309]]
        %s311 = scalar_lea.vmem %s1, %s310
        %v312 = vld [vmem:[%s311] sm:$0x1]
        %313 = vst.msk [vmem:[#allocation2 + $0x10] sm:$0x1] %vm231, %v312
        %s314 = sadd.s32 %s309, 1
        %s315 = sld [smem:[#allocation4 + %s314]]
        %s316 = scalar_lea.vmem %s1, %s315
        %v317 = vld [vmem:[%s316] sm:$0x1]
        %318 = vst.msk [vmem:[#allocation2 + $0x11] sm:$0x1] %vm231, %v317
        %s319 = sadd.s32 %s309, 2
        %s320 = sld [smem:[#allocation4 + %s319]]
        %s321 = scalar_lea.vmem %s1, %s320
        %v322 = vld [vmem:[%s321] sm:$0x1]
        %323 = vst.msk [vmem:[#allocation2 + $0x12] sm:$0x1] %vm231, %v322
        %s324 = sadd.s32 %s309, 3
        %s325 = sld [smem:[#allocation4 + %s324]]
        %s326 = scalar_lea.vmem %s1, %s325
        %v327 = vld [vmem:[%s326] sm:$0x1]
        %328 = vst.msk [vmem:[#allocation2 + $0x13] sm:$0x1] %vm231, %v327
        %s329 = sadd.s32 %s309, 4
        %s330 = sld [smem:[#allocation4 + %s329]]
        %s331 = scalar_lea.vmem %s1, %s330
        %v332 = vld [vmem:[%s331] sm:$0x1]
        %333 = vst.msk [vmem:[#allocation2 + $0x14] sm:$0x1] %vm231, %v332
        %s334 = sadd.s32 %s309, 5
        %s335 = sld [smem:[#allocation4 + %s334]]
        %s336 = scalar_lea.vmem %s1, %s335
        %v337 = vld [vmem:[%s336] sm:$0x1]
        %338 = vst.msk [vmem:[#allocation2 + $0x15] sm:$0x1] %vm231, %v337
        %s339 = sadd.s32 %s309, 6
        %s340 = sld [smem:[#allocation4 + %s339]]
        %s341 = scalar_lea.vmem %s1, %s340
        %v342 = vld [vmem:[%s341] sm:$0x1]
        %343 = vst.msk [vmem:[#allocation2 + $0x16] sm:$0x1] %vm231, %v342
        %s344 = sadd.s32 %s309, 7
        %s345 = sld [smem:[#allocation4 + %s344]]
        %s346 = scalar_lea.vmem %s1, %s345
        %v347 = vld [vmem:[%s346] sm:$0x1]
        %348 = vst.msk [vmem:[#allocation2 + $0x17] sm:$0x1] %vm231, %v347
        %s349 = sadd.s32 %s309, 8
        %s350 = sld [smem:[#allocation4 + %s349]]
        %s351 = scalar_lea.vmem %s1, %s350
        %v352 = vld [vmem:[%s351] sm:$0x1]
        %353 = vst.msk [vmem:[#allocation2 + $0x18] sm:$0x1] %vm231, %v352
        %s354 = sadd.s32 %s309, 9
        %s355 = sld [smem:[#allocation4 + %s354]]
        %s356 = scalar_lea.vmem %s1, %s355
        %v357 = vld [vmem:[%s356] sm:$0x1]
        %358 = vst.msk [vmem:[#allocation2 + $0x19] sm:$0x1] %vm231, %v357
        %s359 = sadd.s32 %s309, 10
        %s360 = sld [smem:[#allocation4 + %s359]]
        %s361 = scalar_lea.vmem %s1, %s360
        %v362 = vld [vmem:[%s361] sm:$0x1]
        %363 = vst.msk [vmem:[#allocation2 + $0x1a] sm:$0x1] %vm231, %v362
        %s364 = sadd.s32 %s309, 11
        %s365 = sld [smem:[#allocation4 + %s364]]
        %s366 = scalar_lea.vmem %s1, %s365
        %v367 = vld [vmem:[%s366] sm:$0x1]
        %368 = vst.msk [vmem:[#allocation2 + $0x1b] sm:$0x1] %vm231, %v367
        %s369 = sadd.s32 %s309, 12
        %s370 = sld [smem:[#allocation4 + %s369]]
        %s371 = scalar_lea.vmem %s1, %s370
        %v372 = vld [vmem:[%s371] sm:$0x1]
        %373 = vst.msk [vmem:[#allocation2 + $0x1c] sm:$0x1] %vm231, %v372
        %s374 = sadd.s32 %s309, 13
        %s375 = sld [smem:[#allocation4 + %s374]]
        %s376 = scalar_lea.vmem %s1, %s375
        %v377 = vld [vmem:[%s376] sm:$0x1]
        %378 = vst.msk [vmem:[#allocation2 + $0x1d] sm:$0x1] %vm231, %v377
        %s379 = sadd.s32 %s309, 14
        %s380 = sld [smem:[#allocation4 + %s379]]
        %s381 = scalar_lea.vmem %s1, %s380
        %v382 = vld [vmem:[%s381] sm:$0x1]
        %383 = vst.msk [vmem:[#allocation2 + $0x1e] sm:$0x1] %vm231, %v382
        %s384 = sadd.s32 %s309, 15
        %s385 = sld [smem:[#allocation4 + %s384]]
        %s386 = scalar_lea.vmem %s1, %s385
        %v387 = vld [vmem:[%s386] sm:$0x1]
        %388 = vst.msk [vmem:[#allocation2 + $0x1f] sm:$0x1] %vm231, %v387
        %v389 = vld [vmem:[#allocation2] sm:$0xff]
        %v390 = vld [vmem:[#allocation2 + $0x8] sm:$0xff]
        %v391 = vld [vmem:[#allocation2 + $0x10] sm:$0xff]
        %v392 = vld [vmem:[#allocation2 + $0x18] sm:$0xff]
        %v393 = vpack.c.bf16 %v390, %v389
        %v394 = vpack.c.bf16 %v392, %v391
        %v395 = vld [vmem:[#allocation5] sm:$0xff]
        %v396 = vld [vmem:[#allocation5 + $0x8] sm:$0xf]
        %v397 = vld [vmem:[#allocation5 + $0xc] sm:$0xff]
        %v398 = vld [vmem:[#allocation5 + $0x14] sm:$0xf]
        %v399 = vld [vmem:[#allocation5 + $0x18] sm:$0xff]
        %v400 = vld [vmem:[#allocation5 + $0x20] sm:$0xf]
        %v401 = vld [vmem:[#allocation5 + $0x24] sm:$0xff]
        %v402 = vld [vmem:[#allocation5 + $0x2c] sm:$0xf]
        %v411 = vunpack.c.l.b16 %v395
        %v412 = vunpack.c.h.b16 %v395
        %v413 = vunpack.c.l.b16 %v396
        %v414 = vunpack.c.l.b16 %v397
        %v415 = vunpack.c.h.b16 %v397
        %v416 = vunpack.c.l.b16 %v398
        %v417 = vunpack.c.l.b16 %v399
        %v418 = vunpack.c.h.b16 %v399
        %v419 = vunpack.c.l.b16 %v400
        %v420 = vunpack.c.l.b16 %v401
        %v421 = vunpack.c.h.b16 %v401
        %v422 = vunpack.c.l.b16 %v402
        %v423 = vpack.c.b16 %v414, %v411
        %v424 = vpack.c.b16 %v415, %v412
        %v425 = vpack.c.b16 %v416, %v413
        %v426 = vpack.c.b16 %v420, %v417
        %v427 = vpack.c.b16 %v421, %v418
        %v428 = vpack.c.b16 %v422, %v419
        %vm435 = vcmask 261120
        %v437 = vsel %vm435, %v393, 0
        %v440 = vsel %vm435, %v394, 0
        %442 = vmatprep.subr.bf16.mxu0 %v424
        %443 = vmatpush1.bf16.msra.mxu0 %v423
        %444 = vmatprep.subr.bf16.mxu0 %v427
        %445 = vmatpush1.bf16.msra.mxu0 %v426
        %446 = vmatprep.subr.bf16.mxu0 0
        %447 = vmatpush1.bf16.msra.mxu0 0
        %448 = vmatprep.subr.bf16.mxu0 0
        %449 = vmatpush1.bf16.msra.mxu0 0
        %450 = vmatprep.subr.bf16.mxu0 0
        %451 = vmatpush1.bf16.msra.mxu0 0
        %452 = vmatprep.subr.bf16.mxu0 0
        %453 = vmatpush1.bf16.msra.mxu0 0
        %454 = vmatprep.subr.bf16.mxu0 0
        %455 = vmatpush1.bf16.msra.mxu0 0
        %456 = vmatprep.subr.bf16.mxu0 0
        %457 = vmatpush1.bf16.msra.mxu0 0
        %458 = vmatprep.subr.bf16.mxu0 0
        %459 = vmatpush1.bf16.msra.mxu0 0
        %460 = vmatprep.subr.bf16.mxu0 0
        %461 = vmatpush1.bf16.msra.mxu0 0
        %462 = vmatprep.subr.bf16.mxu0 0
        %463 = vmatpush1.bf16.msra.mxu0 0
        %464 = vmatprep.subr.bf16.mxu0 0
        %465 = vmatpush1.bf16.msra.mxu0 0
        %466 = vmatprep.subr.bf16.mxu0 0
        %467 = vmatpush1.bf16.msra.mxu0 0
        %468 = vmatprep.subr.bf16.mxu0 0
        %469 = vmatpush1.bf16.msra.mxu0 0
        %470 = vmatprep.subr.bf16.mxu0 0
        %471 = vmatpush1.bf16.msra.mxu0 0
        %472 = vmatprep.subr.bf16.mxu0 0
        %473 = vmatpush1.bf16.msra.mxu0 0
        %474 = vmatprep.mubr.bf16.mxu0 0
        %475 = vmatmul.mubr.bf16.gmra.mrb[0].mxu0 %v437
        %v476 = vpop.f32.mrb[0].mxu0
        %v477 = vadd.f32 0.0, %v476
        %v478 = vpop.f32.mrb[0].mxu0
        %v479 = vadd.f32 0.0, %v478
        %v480 = vpop.f32.mrb[0].mxu0
        %v481 = vadd.f32 0.0, %v480
        %v482 = vpop.f32.mrb[0].mxu0
        %v483 = vadd.f32 0.0, %v482
        %484 = vmatprep.mubr.bf16.mxu0 0
        %485 = vmatmul.mubr.bf16.gmra.mrb[0].mxu0 %v440
        %v486 = vpop.f32.mrb[0].mxu0
        %v487 = vadd.f32 0.0, %v486
        %v488 = vpop.f32.mrb[0].mxu0
        %v489 = vadd.f32 0.0, %v488
        %v490 = vpop.f32.mrb[0].mxu0
        %v491 = vadd.f32 0.0, %v490
        %v492 = vpop.f32.mrb[0].mxu0
        %v493 = vadd.f32 0.0, %v492
        %494 = vdwg.mxu0
        %495 = vmatprep.subr.bf16.mxu0 0
        %496 = vmatpush1.bf16.msra.mxu0 %v425
        %497 = vmatprep.subr.bf16.mxu0 0
        %498 = vmatpush1.bf16.msra.mxu0 %v428
        %499 = vmatprep.subr.bf16.mxu0 0
        %500 = vmatpush1.bf16.msra.mxu0 0
        %501 = vmatprep.subr.bf16.mxu0 0
        %502 = vmatpush1.bf16.msra.mxu0 0
        %503 = vmatprep.subr.bf16.mxu0 0
        %504 = vmatpush1.bf16.msra.mxu0 0
        %505 = vmatprep.subr.bf16.mxu0 0
        %506 = vmatpush1.bf16.msra.mxu0 0
        %507 = vmatprep.subr.bf16.mxu0 0
        %508 = vmatpush1.bf16.msra.mxu0 0
        %509 = vmatprep.subr.bf16.mxu0 0
        %510 = vmatpush1.bf16.msra.mxu0 0
        %511 = vmatprep.subr.bf16.mxu0 0
        %512 = vmatpush1.bf16.msra.mxu0 0
        %513 = vmatprep.subr.bf16.mxu0 0
        %514 = vmatpush1.bf16.msra.mxu0 0
        %515 = vmatprep.subr.bf16.mxu0 0
        %516 = vmatpush1.bf16.msra.mxu0 0
        %517 = vmatprep.subr.bf16.mxu0 0
        %518 = vmatpush1.bf16.msra.mxu0 0
        %519 = vmatprep.subr.bf16.mxu0 0
        %520 = vmatpush1.bf16.msra.mxu0 0
        %521 = vmatprep.subr.bf16.mxu0 0
        %522 = vmatpush1.bf16.msra.mxu0 0
        %523 = vmatprep.subr.bf16.mxu0 0
        %524 = vmatpush1.bf16.msra.mxu0 0
        %525 = vmatprep.subr.bf16.mxu0 0
        %526 = vmatpush1.bf16.msra.mxu0 0
        %527 = vmatprep.mubr.bf16.mxu0 0
        %528 = vmatmul.mubr.bf16.gmra.mrb[0].mxu0 %v437
        %v529 = vpop.f32.mrb[0].mxu0
        %v530 = vadd.f32 0.0, %v529
        %v531 = vpop.f32.mrb[0].mxu0
        %v532 = vpop.f32.mrb[0].mxu0
        %v533 = vadd.f32 0.0, %v532
        %v534 = vpop.f32.mrb[0].mxu0
        %535 = vmatprep.mubr.bf16.mxu0 0
        %536 = vmatmul.mubr.bf16.gmra.mrb[0].mxu0 %v440
        %v537 = vpop.f32.mrb[0].mxu0
        %v538 = vadd.f32 0.0, %v537
        %v539 = vpop.f32.mrb[0].mxu0
        %v540 = vpop.f32.mrb[0].mxu0
        %v541 = vadd.f32 0.0, %v540
        %v542 = vpop.f32.mrb[0].mxu0
        %543 = vdwg.mxu0
        %vm548 = vcmask 1046528
        %v549 = vrot.slane %v477, 1
        %v550 = vrot.slane %v481, 1
        %v551 = vsel %vm548, %v549, %v550
        %v552 = vrot.slane %v487, 1
        %v553 = vrot.slane %v491, 1
        %v554 = vsel %vm548, %v552, %v553
        %555 = vrot.lane.b32.xlu0 %v551, 96
        %v556 = vpop.permute.xlu0 %555
        %557 = vrot.lane.b32.xlu0 %v550, 96
        %v558 = vpop.permute.xlu0 %557
        %559 = vrot.lane.b32.xlu0 %v554, 96
        %v560 = vpop.permute.xlu0 %559
        %561 = vrot.lane.b32.xlu0 %v553, 96
        %v562 = vpop.permute.xlu0 %561
        %v567 = vadd.f32 %v477, %v556
        %v568 = vadd.f32 %v481, %v558
        %v569 = vadd.f32 %v487, %v560
        %v570 = vadd.f32 %v491, %v562
        %vm571 = vcmask 1045504
        %v572 = vrot.slane %v477, 2
        %v573 = vrot.slane %v481, 2
        %v574 = vsel %vm571, %v572, %v573
        %v575 = vrot.slane %v487, 2
        %v576 = vrot.slane %v491, 2
        %v577 = vsel %vm571, %v575, %v576
        %578 = vrot.lane.b32.xlu0 %v574, 64
        %v579 = vpop.permute.xlu0 %578
        %580 = vrot.lane.b32.xlu0 %v573, 64
        %v581 = vpop.permute.xlu0 %580
        %582 = vrot.lane.b32.xlu0 %v577, 64
        %v583 = vpop.permute.xlu0 %582
        %584 = vrot.lane.b32.xlu0 %v576, 64
        %v585 = vpop.permute.xlu0 %584
        %v590 = vadd.f32 %v567, %v579
        %v591 = vadd.f32 %v568, %v581
        %v592 = vadd.f32 %v569, %v583
        %v593 = vadd.f32 %v570, %v585
        %v594 = vsel %vm435, %v590, -inf
        %vm595 = vcmask 259072
        %v596 = vsel %vm595, %v591, -inf
        %v597 = vmax.f32 %v594, %v596
        %v598 = vrot.slane %v597, 4
        %v599 = vmax.f32 %v597, %v598
        %v600 = vrot.slane %v599, 2
        %v601 = vmax.f32 %v599, %v600
        %v602 = vrot.slane %v601, 1
        %v603 = vmax.f32 %v601, %v602
        %v604 = vsel %vm435, %v592, -inf
        %v605 = vsel %vm595, %v593, -inf
        %v606 = vmax.f32 %v604, %v605
        %v607 = vrot.slane %v606, 4
        %v608 = vmax.f32 %v606, %v607
        %v609 = vrot.slane %v608, 2
        %v610 = vmax.f32 %v608, %v609
        %v611 = vrot.slane %v610, 1
        %v612 = vmax.f32 %v610, %v611
        %v617 = vrot.slane %v479, 1
        %v618 = vrot.slane %v483, 1
        %v619 = vsel %vm548, %v617, %v618
        %v620 = vrot.slane %v489, 1
        %v621 = vrot.slane %v493, 1
        %v622 = vsel %vm548, %v620, %v621
        %623 = vrot.lane.b32.xlu0 %v619, 96
        %v624 = vpop.permute.xlu0 %623
        %625 = vrot.lane.b32.xlu0 %v618, 96
        %v626 = vpop.permute.xlu0 %625
        %627 = vrot.lane.b32.xlu0 %v622, 96
        %v628 = vpop.permute.xlu0 %627
        %629 = vrot.lane.b32.xlu0 %v621, 96
        %v630 = vpop.permute.xlu0 %629
        %v635 = vadd.f32 %v477, %v624
        %v636 = vadd.f32 %v481, %v626
        %v637 = vadd.f32 %v487, %v628
        %v638 = vadd.f32 %v491, %v630
        %v639 = vrot.slane %v479, 2
        %v640 = vrot.slane %v483, 2
        %v641 = vsel %vm571, %v639, %v640
        %v642 = vrot.slane %v489, 2
        %v643 = vrot.slane %v493, 2
        %v644 = vsel %vm571, %v642, %v643
        %645 = vrot.lane.b32.xlu0 %v641, 64
        %v646 = vpop.permute.xlu0 %645
        %647 = vrot.lane.b32.xlu0 %v640, 64
        %v648 = vpop.permute.xlu0 %647
        %649 = vrot.lane.b32.xlu0 %v644, 64
        %v650 = vpop.permute.xlu0 %649
        %651 = vrot.lane.b32.xlu0 %v643, 64
        %v652 = vpop.permute.xlu0 %651
        %v657 = vadd.f32 %v635, %v646
        %v658 = vadd.f32 %v636, %v648
        %v659 = vadd.f32 %v637, %v650
        %v660 = vadd.f32 %v638, %v652
        %vm661 = vcmask 1044480
        %v662 = vrot.slane %v479, 3
        %v663 = vrot.slane %v483, 3
        %v664 = vsel %vm661, %v662, %v663
        %v665 = vrot.slane %v489, 3
        %v666 = vrot.slane %v493, 3
        %v667 = vsel %vm661, %v665, %v666
        %668 = vrot.lane.b32.xlu0 %v664, 32
        %v669 = vpop.permute.xlu0 %668
        %670 = vrot.lane.b32.xlu0 %v663, 32
        %v671 = vpop.permute.xlu0 %670
        %672 = vrot.lane.b32.xlu0 %v667, 32
        %v673 = vpop.permute.xlu0 %672
        %674 = vrot.lane.b32.xlu0 %v666, 32
        %v675 = vpop.permute.xlu0 %674
        %v680 = vadd.f32 %v657, %v669
        %v681 = vadd.f32 %v658, %v671
        %v682 = vadd.f32 %v659, %v673
        %v683 = vadd.f32 %v660, %v675
        %vm684 = vcmask 1048320
        %v685 = vsel %vm684, %v680, -inf
        %vm686 = vcmask 1045248
        %v687 = vsel %vm686, %v681, -inf
        %v688 = vmax.f32 %v685, %v687
        %v689 = vrot.slane %v688, 4
        %v690 = vmax.f32 %v688, %v689
        %v691 = vrot.slane %v690, 2
        %v692 = vmax.f32 %v690, %v691
        %v693 = vrot.slane %v692, 1
        %v694 = vmax.f32 %v692, %v693
        %v695 = vsel %vm684, %v682, -inf
        %v696 = vsel %vm686, %v683, -inf
        %v697 = vmax.f32 %v695, %v696
        %v698 = vrot.slane %v697, 4
        %v699 = vmax.f32 %v697, %v698
        %v700 = vrot.slane %v699, 2
        %v701 = vmax.f32 %v699, %v700
        %v702 = vrot.slane %v701, 1
        %v703 = vmax.f32 %v701, %v702
        %v708 = vrot.slane %v530, 1
        %v709 = vrot.slane %v533, 1
        %v710 = vsel %vm548, %v708, %v709
        %v711 = vrot.slane %v538, 1
        %v712 = vrot.slane %v541, 1
        %v713 = vsel %vm548, %v711, %v712
        %714 = vrot.lane.b32.xlu0 %v710, 96
        %v715 = vpop.permute.xlu0 %714
        %716 = vrot.lane.b32.xlu0 %v709, 96
        %v717 = vpop.permute.xlu0 %716
        %718 = vrot.lane.b32.xlu0 %v713, 96
        %v719 = vpop.permute.xlu0 %718
        %720 = vrot.lane.b32.xlu0 %v712, 96
        %v721 = vpop.permute.xlu0 %720
        %v726 = vadd.f32 %v479, %v715
        %v727 = vadd.f32 %v483, %v717
        %v728 = vadd.f32 %v489, %v719
        %v729 = vadd.f32 %v493, %v721
        %v730 = vrot.slane %v530, 2
        %v731 = vrot.slane %v533, 2
        %v732 = vsel %vm571, %v730, %v731
        %v733 = vrot.slane %v538, 2
        %v734 = vrot.slane %v541, 2
        %v735 = vsel %vm571, %v733, %v734
        %736 = vrot.lane.b32.xlu0 %v732, 64
        %v737 = vpop.permute.xlu0 %736
        %738 = vrot.lane.b32.xlu0 %v731, 64
        %v739 = vpop.permute.xlu0 %738
        %740 = vrot.lane.b32.xlu0 %v735, 64
        %v741 = vpop.permute.xlu0 %740
        %742 = vrot.lane.b32.xlu0 %v734, 64
        %v743 = vpop.permute.xlu0 %742
        %v748 = vadd.f32 %v726, %v737
        %v749 = vadd.f32 %v727, %v739
        %v750 = vadd.f32 %v728, %v741
        %v751 = vadd.f32 %v729, %v743
        %v752 = vrot.slane %v530, 3
        %v753 = vrot.slane %v533, 3
        %v754 = vsel %vm661, %v752, %v753
        %v755 = vrot.slane %v538, 3
        %v756 = vrot.slane %v541, 3
        %v757 = vsel %vm661, %v755, %v756
        %758 = vrot.lane.b32.xlu0 %v754, 32
        %v759 = vpop.permute.xlu0 %758
        %760 = vrot.lane.b32.xlu0 %v753, 32
        %v761 = vpop.permute.xlu0 %760
        %762 = vrot.lane.b32.xlu0 %v757, 32
        %v763 = vpop.permute.xlu0 %762
        %764 = vrot.lane.b32.xlu0 %v756, 32
        %v765 = vpop.permute.xlu0 %764
        %v770 = vadd.f32 %v748, %v759
        %v771 = vadd.f32 %v749, %v761
        %v772 = vadd.f32 %v750, %v763
        %v773 = vadd.f32 %v751, %v765
        %vm774 = vcmask 1043456
        %v775 = vrot.slane %v530, 4
        %v776 = vrot.slane %v533, 4
        %v777 = vsel %vm774, %v775, %v776
        %v778 = vrot.slane %v538, 4
        %v779 = vrot.slane %v541, 4
        %v780 = vsel %vm774, %v778, %v779
        %v785 = vadd.f32 %v770, %v777
        %v786 = vadd.f32 %v771, %v776
        %v787 = vadd.f32 %v772, %v780
        %v788 = vadd.f32 %v773, %v779
        %v789 = vsel %vm684, %v785, -inf
        %vm790 = vcmask 1044224
        %v791 = vsel %vm790, %v786, -inf
        %v792 = vmax.f32 %v789, %v791
        %v793 = vrot.slane %v792, 4
        %v794 = vmax.f32 %v792, %v793
        %v795 = vrot.slane %v794, 2
        %v796 = vmax.f32 %v794, %v795
        %v797 = vrot.slane %v796, 1
        %v798 = vmax.f32 %v796, %v797
        %v799 = vsel %vm684, %v787, -inf
        %v800 = vsel %vm790, %v788, -inf
        %v801 = vmax.f32 %v799, %v800
        %v802 = vrot.slane %v801, 4
        %v803 = vmax.f32 %v801, %v802
        %v804 = vrot.slane %v803, 2
        %v805 = vmax.f32 %v803, %v804
        %v806 = vrot.slane %v805, 1
        %v807 = vmax.f32 %v805, %v806
        %vm810 = vcmask 1041409
        %v811 = vsel %vm810, %v612, %v603
        %v815 = vsel %vm810, %v703, %v694
        %816 = vrot.lane.b32.xlu0 %v815, 64
        %v817 = vpop.permute.xlu0 %816
        %v821 = vsel %vm810, %v807, %v798
        %822 = vrot.lane.b32.xlu0 %v821, 96
        %v823 = vpop.permute.xlu0 %822
        %v825 = vsel %vm435, %v811, %v817
        %vm826 = vcmask 523264
        %v827 = vsel %vm826, %v825, %v823
        %v828 = vld [vmem:[%s3] sm:$0x1]
        %v830 = vlaneseq
        %v831 = vshrl.u32 %v830, 7
        %v832 = vsub.s32 0, %v831
        %v833 = vrot.slane %v828, %v832
        %v835 = vadd.f32 %v827, %v833
        %v836 = vmax.f32 %v835, 0.0
        %v837 = vld [vmem:[%s4] sm:$0xff]
        %v838 = vld [vmem:[%s4 + $0x8] sm:$0xff]
        %v839 = vld [vmem:[%s4 + $0x10] sm:$0xff]
        %v840 = vld [vmem:[%s4 + $0x18] sm:$0xff]
        %v841 = vld [vmem:[%s4 + $0x20] sm:$0xff]
        %v842 = vld [vmem:[%s4 + $0x28] sm:$0xff]
        %v843 = vld [vmem:[%s4 + $0x30] sm:$0xff]
        %v844 = vld [vmem:[%s4 + $0x38] sm:$0xff]
        %v845 = vld [vmem:[%s4 + $0x40] sm:$0xff]
        %v846 = vld [vmem:[%s4 + $0x48] sm:$0xff]
        %v847 = vld [vmem:[%s4 + $0x50] sm:$0xff]
        %v848 = vld [vmem:[%s4 + $0x58] sm:$0xff]
        %v849 = vld [vmem:[%s5] sm:$0x1]
        %v851 = vlaneseq
        %v852 = vshrl.u32 %v851, 7
        %v853 = vsub.s32 0, %v852
        %v854 = vrot.slane %v849, %v853
        %vm856 = vcmask 785408
        %v858 = vsel %vm856, %v836, 0
        %860 = vmatprep.subr.mxu0 0.0
        %861 = vmatpush1.msra.mxu0 %v837
        %862 = vmatprep.subr.mxu0 0.0
        %863 = vmatpush1.msra.mxu0 %v838
        %864 = vmatprep.subr.mxu0 0.0
        %865 = vmatpush1.msra.mxu0 %v839
        %866 = vmatprep.subr.mxu0 0.0
        %867 = vmatpush1.msra.mxu0 %v840
        %868 = vmatprep.subr.mxu0 0.0
        %869 = vmatpush1.msra.mxu0 %v841
        %870 = vmatprep.subr.mxu0 0.0
        %871 = vmatpush1.msra.mxu0 %v842
        %872 = vmatprep.subr.mxu0 0.0
        %873 = vmatpush1.msra.mxu0 %v843
        %874 = vmatprep.subr.mxu0 0.0
        %875 = vmatpush1.msra.mxu0 %v844
        %876 = vmatprep.subr.mxu0 0.0
        %877 = vmatpush1.msra.mxu0 %v845
        %878 = vmatprep.subr.mxu0 0.0
        %879 = vmatpush1.msra.mxu0 %v846
        %880 = vmatprep.subr.mxu0 0.0
        %881 = vmatpush1.msra.mxu0 %v847
        %882 = vmatprep.subr.mxu0 0.0
        %883 = vmatpush1.msra.mxu0 %v848
        %884 = vmatprep.subr.mxu0 0.0
        %885 = vmatpush1.msra.mxu0 0.0
        %886 = vmatprep.subr.mxu0 0.0
        %887 = vmatpush1.msra.mxu0 0.0
        %888 = vmatprep.subr.mxu0 0.0
        %889 = vmatpush1.msra.mxu0 0.0
        %890 = vmatprep.subr.mxu0 0.0
        %891 = vmatpush1.msra.mxu0 0.0
        %892 = vmatprep.subr.mxu0 0.0
        %893 = vmatpush1.msra.mxu0 0.0
        %894 = vmatprep.subr.mxu0 0.0
        %895 = vmatpush1.msra.mxu0 0.0
        %896 = vmatprep.subr.mxu0 0.0
        %897 = vmatpush1.msra.mxu0 0.0
        %898 = vmatprep.subr.mxu0 0.0
        %899 = vmatpush1.msra.mxu0 0.0
        %900 = vmatprep.subr.mxu0 0.0
        %901 = vmatpush1.msra.mxu0 0.0
        %902 = vmatprep.subr.mxu0 0.0
        %903 = vmatpush1.msra.mxu0 0.0
        %904 = vmatprep.subr.mxu0 0.0
        %905 = vmatpush1.msra.mxu0 0.0
        %906 = vmatprep.subr.mxu0 0.0
        %907 = vmatpush1.msra.mxu0 0.0
        %908 = vmatprep.subr.mxu0 0.0
        %909 = vmatpush1.msra.mxu0 0.0
        %910 = vmatprep.subr.mxu0 0.0
        %911 = vmatpush1.msra.mxu0 0.0
        %912 = vmatprep.subr.mxu0 0.0
        %913 = vmatpush1.msra.mxu0 0.0
        %914 = vmatprep.subr.mxu0 0.0
        %915 = vmatpush1.msra.mxu0 0.0
        %916 = vmatprep.subr.mxu0 0.0
        %917 = vmatpush1.msra.mxu0 0.0
        %918 = vmatprep.subr.mxu0 0.0
        %919 = vmatpush1.msra.mxu0 0.0
        %920 = vmatprep.subr.mxu0 0.0
        %921 = vmatpush1.msra.mxu0 0.0
        %922 = vmatprep.subr.mxu0 0.0
        %923 = vmatpush1.msra.mxu0 0.0
        %924 = vmatprep.mubr.f32.mxu0 0.0
        %925 = vmatmul.mubr.f32.gmra.mrb[0].mxu0 %v858
        %v926 = vpop.f32.mrb[0].mxu0
        %v927 = vadd.f32 %v854, %v926
        %v928 = vpop.f32.mrb[0].mxu0
        %929 = vdwg.mxu0
        %vm930 = vcmask 1041408
        %v931 = vsel %vm930, %v927, -inf
        %932 = vmax.xlane.f32.xlu0 %v931
        %v933 = vpop.xlane.xlu0 %932
        %v934 = vsub.f32 %v927, %v933
        %v935 = vmul.f32 %v934, 1.442695
        %v936 = vpow.pop %v935
        %v937 = vsel %vm930, %v936, 0.0
        %938 = vadd.xlane.f32.xlu0 %v937
        %v939 = vpop.xlane.xlu0 %938
        %v940 = vrcp.pop %v939
        %v941 = vmul.f32 %v936, %v940
        %942 = vst [vmem:[%s224] sm:$0x3] %v941
        %p943 = scmp.lt.s32.totalorder %s24, 1
        %s944 = scalar_select %p943, %s24, 1
        %s945 = smul.addr %s944, 2
        %s946 = scalar_lea.vmem %s6, %s945
        // Predicated region
        $region45: #{textcnn_forward.1} parent=39 // pred_check
          %p947 = pneg %p147
        $region46: #{textcnn_forward.1} parent=39 // pred_check_branch
          %949 = sbr.rel (%p947) target = $region48
        $region47: #{textcnn_forward.1} parent=39 // pred_region
          _
        $region48: #{textcnn_forward.1} parent=39 // pred_fallthru
          _
      $region40: #{textcnn_forward.1} parent=5 // pred_fallthru
        _
      %p950 = scmp.le.s32.totalorder 2, %s19
      // Predicated region
      $region49: #{textcnn_forward.1} parent=5 // pred_check
        %p951 = pneg %p950
      $region50: #{textcnn_forward.1} parent=5 // pred_check_branch
        %953 = sbr.rel (%p951) target = $region52
      $region51: #{textcnn_forward.1} parent=5 // pred_region
        %s954 = ssub.s32 %s19, 2
        // Predicated region
        $region53: #{textcnn_forward.1} parent=51 // pred_check
          %p955 = pneg %p153
        $region54: #{textcnn_forward.1} parent=51 // pred_check_branch
          %957 = sbr.rel (%p955) target = $region56
        $region55: #{textcnn_forward.1} parent=51 // pred_region
          %p958 = scmp.lt.s32.totalorder %s25, 1
          %s959 = scalar_select %p958, %s25, 1
          %s960 = smul.addr %s959, 2
          %s961 = scalar_lea.vmem %s6, %s960
        $region56: #{textcnn_forward.1} parent=51 // pred_fallthru
          _
      $region52: #{textcnn_forward.1} parent=5 // pred_fallthru
        _
    $region6: #{textcnn_forward.1} parent=1 // loop_footer
      %s23 = sadd.s32 1, %s19
    $region7: #{textcnn_forward.1} parent=1 // loop_footer_branch
      %18 = sbr.rel target = $region3
    $region8: #{textcnn_forward.1} parent=1 // loop_exit
      _
    %962 = vsyncpa [#allocation6], 1
    %s963 = scalar_lea.sflag [#allocation6], 1
    %964 = vsyncpa %s963, 1

</llo_original>
